<compile_context>
chip_gen: v7x
topology: tpu7x:2x2x1
jax: 0.10.0
libtpu: 0.0.40
codegen_flags: <defaults>
</compile_context>

<pallas_src>
import functools

import jax
import jax.numpy as jnp
from jax import lax
from jax.experimental import pallas as pl
from jax.experimental.pallas import tpu as pltpu


def _squash(s, eps=1e-12):
    # squash over the last dim:  sq * s / ((1 + sq) * sqrt(sq)),
    # rewritten as EUP-friendly rsqrt / approximate-reciprocal (item 7).
    sq = jnp.sum(s * s, axis=-1, keepdims=True)
    scale = sq * lax.rsqrt(sq + eps) * pl.reciprocal(1.0 + sq, approx=True)
    return s * scale


def digit_caps_kernel(x_ref, w_ref, o_ref, *, num_iters):
    # x_ref: (I, 1, B, 1, R)   w_ref: (I, Cb, 1, O, R)   o_ref: (Cb, B, O)
    num_in = x_ref.shape[0]

    # Prediction vectors u[c, b, o, r] = sum_i x[b, r, i] * W[c, r, i, o],
    # built directly in (Cb, B, O, R): R (route nodes) on lanes, O on sublanes.
    # Unrolled multiply-accumulate over the small I=8 contraction axis -- no rank-4
    # broadcast temporary, no relayouts.
    u = x_ref[0] * w_ref[0]                                  # (Cb, B, O, R)
    for i in range(1, num_in):
        u = u + x_ref[i] * w_ref[i]

    # The logit update sums over O, so logits are constant along O: carry (Cb, B, 1, R).
    u_sum_o = jnp.sum(u, axis=2, keepdims=True)              # (Cb, B, 1, R)
    b_logits = jnp.zeros_like(u_sum_o)                       # (Cb, B, 1, R)

    # Routing loop: num_iters is a Python int -> fully unrolled at trace time (item 9).
    v = jnp.zeros(o_ref.shape, jnp.float32)
    for it in range(num_iters):
        # softmax over route nodes R == last-axis (lane) reductions (item 6)
        m = jnp.max(b_logits, axis=-1, keepdims=True)
        e = jnp.exp(b_logits - m)
        c_coef = e / jnp.sum(e, axis=-1, keepdims=True)      # (Cb, B, 1, R)

        s = jnp.sum(u * c_coef, axis=-1)                     # (Cb, B, O)
        v = _squash(s)                                       # (Cb, B, O)

        if it < num_iters - 1:
            # b += (u * c).sum over O  ==  c * (sum_O u)   (c is constant along O)
            b_logits = b_logits + c_coef * u_sum_o

    o_ref[...] = v.astype(o_ref.dtype)


def digit_caps(x, weights, num_iters, *, num_class_blocks=1):
    """x: (B, R, I); weights: (C, R, I, O) -> (B, C, O).

    num_class_blocks=1 : fully collapsed single grid step (best on v5e/v6e, 1 TC/chip).
    num_class_blocks=2 : two "parallel" class blocks, one per TensorCore (v7x megacore).
    """
    B, R, I = x.shape
    C, Rw, Iw, O = weights.shape
    assert (Rw, Iw) == (R, I)
    assert num_iters >= 1
    assert C % num_class_blocks == 0
    Cb = C // num_class_blocks

    # Layout plumbing in plain JAX (cheap, outside the kernel):
    #   put route nodes R on the last (lane) axis and the I contraction axis leading.
    x_e = jnp.transpose(x, (2, 0, 1))[:, None, :, None, :]        # (I, 1, B, 1, R)
    w_e = jnp.transpose(weights, (2, 0, 3, 1))[:, :, None, :, :]  # (I, C, 1, O, R)

    kernel = functools.partial(digit_caps_kernel, num_iters=num_iters)

    out_cbo = pl.pallas_call(
        kernel,
        out_shape=jax.ShapeDtypeStruct((C, B, O), jnp.float32),
        grid=(num_class_blocks,),
        in_specs=[
            # x is tiny: every grid step sees the full (I, 1, B, 1, R) block
            pl.BlockSpec((I, 1, B, 1, R), lambda j: (0, 0, 0, 0, 0)),
            # per-step slab of Cb classes of the weights
            pl.BlockSpec((I, Cb, 1, O, R), lambda j: (0, j, 0, 0, 0)),
        ],
        out_specs=pl.BlockSpec((Cb, B, O), lambda j: (j, 0, 0)),
        compiler_params=pltpu.CompilerParams(
            dimension_semantics=("parallel",)),
    )(x_e, w_e)

    # PyTorch: v.squeeze().transpose(0, 1)  ->  (B, C, O)
    return jnp.transpose(out_cbo, (1, 0, 2))


def _reference(x, w, num_iters):
    # pure-JAX replica of the PyTorch forward, for correctness checking
    u = jnp.einsum('bri,crio->cbro', x, w, precision='highest')   # (C, B, R, O)
    b = jnp.zeros_like(u)
    v = None
    for i in range(num_iters):
        c = jax.nn.softmax(b, axis=2)
        s = jnp.sum(u * c, axis=2, keepdims=True)                 # (C, B, 1, O)
        sq = jnp.sum(s * s, axis=-1, keepdims=True)
        v = sq * s / ((1.0 + sq) * jnp.sqrt(sq))
        if i < num_iters - 1:
            b = b + jnp.sum(u * c, axis=-1, keepdims=True)
    return jnp.transpose(v[:, :, 0, :], (1, 0, 2))                # (B, C, O)


if __name__ == "__main__":
    key = jax.random.PRNGKey(0)
    kx, kw = jax.random.split(key)

    # Small shapes consistent with DigitCaps.forward:
    #   x: (batch, num_route_nodes, in_channels), weights: (classes, R, I, O)
    B, R, I, O, C = 2, 64, 8, 16, 10
    num_routing_iters = 3

    x = jax.random.normal(kx, (B, R, I), dtype=jnp.float32)
    weights = jax.random.normal(kw, (C, R, I, O), dtype=jnp.float32)  # ~ torch.randn

    ref = _reference(x, weights, num_routing_iters)

    # Fully collapsed grid (recommended on v5e / v6e: 1 TensorCore per chip).
    out = jax.block_until_ready(digit_caps(x, weights, num_routing_iters))
    assert out.shape == (B, C, O)
    # tolerance accounts for the approximate EUP reciprocal in squash
    assert jnp.allclose(out, ref, atol=1e-3, rtol=2e-2), float(jnp.max(jnp.abs(out - ref)))

    # v7x megacore variant: two parallel class blocks (one per TensorCore).
    out2 = jax.block_until_ready(
        digit_caps(x, weights, num_routing_iters, num_class_blocks=2))
    assert jnp.allclose(out2, ref, atol=1e-3, rtol=2e-2)

    print("KERNEL_OK")
</pallas_src>

<mosaic_0001>
module attributes {stable_mosaic.version = 11 : i64} {
  func.func @digit_caps_kernel(%arg0: i32, %arg1: memref<8x1x2x1x64xf32, #tpu.memory_space<vmem>>, %arg2: memref<8x10x1x16x64xf32, #tpu.memory_space<vmem>>, %arg3: memref<10x2x16xf32, #tpu.memory_space<vmem>>) attributes {dimension_semantics = [#tpu.dimension_semantics<parallel>], iteration_bounds = array<i64: 1>, scalar_prefetch = 0 : i64, scratch_operands = 0 : i64, tpu.core_type = #tpu.core_type<tc>, window_params = [{pipeline_mode = #tpu.pipeline_mode<synchronous>, transform_indices = @transform_0, window_bounds = array<i64: 8, 1, 2, 1, 64>}, {transform_indices = @transform_1, window_bounds = array<i64: 8, 10, 1, 16, 64>}, {transform_indices = @transform_2, window_bounds = array<i64: 10, 2, 16>}]} {
    %c0 = arith.constant 0 : index
    %c0_0 = arith.constant 0 : index
    %c0_1 = arith.constant 0 : index
    %c0_2 = arith.constant 0 : index
    %c0_3 = arith.constant 0 : index
    %0 = vector.load %arg1[%c0, %c0_0, %c0_1, %c0_2, %c0_3] : memref<8x1x2x1x64xf32, #tpu.memory_space<vmem>>, vector<1x1x2x1x64xf32>
    %1 = vector.shape_cast %0 : vector<1x1x2x1x64xf32> to vector<1x2x1x64xf32>
    %c0_4 = arith.constant 0 : index
    %c0_5 = arith.constant 0 : index
    %c0_6 = arith.constant 0 : index
    %c0_7 = arith.constant 0 : index
    %c0_8 = arith.constant 0 : index
    %2 = vector.load %arg2[%c0_4, %c0_5, %c0_6, %c0_7, %c0_8] : memref<8x10x1x16x64xf32, #tpu.memory_space<vmem>>, vector<1x10x1x16x64xf32>
    %3 = vector.shape_cast %2 : vector<1x10x1x16x64xf32> to vector<10x1x16x64xf32>
    %4 = vector.broadcast %1 : vector<1x2x1x64xf32> to vector<10x2x16x64xf32>
    %5 = vector.broadcast %3 : vector<10x1x16x64xf32> to vector<10x2x16x64xf32>
    %6 = arith.mulf %4, %5 : vector<10x2x16x64xf32>
    %c1 = arith.constant 1 : index
    %c0_9 = arith.constant 0 : index
    %c0_10 = arith.constant 0 : index
    %c0_11 = arith.constant 0 : index
    %c0_12 = arith.constant 0 : index
    %7 = vector.load %arg1[%c1, %c0_9, %c0_10, %c0_11, %c0_12] : memref<8x1x2x1x64xf32, #tpu.memory_space<vmem>>, vector<1x1x2x1x64xf32>
    %8 = vector.shape_cast %7 : vector<1x1x2x1x64xf32> to vector<1x2x1x64xf32>
    %c1_13 = arith.constant 1 : index
    %c0_14 = arith.constant 0 : index
    %c0_15 = arith.constant 0 : index
    %c0_16 = arith.constant 0 : index
    %c0_17 = arith.constant 0 : index
    %9 = vector.load %arg2[%c1_13, %c0_14, %c0_15, %c0_16, %c0_17] : memref<8x10x1x16x64xf32, #tpu.memory_space<vmem>>, vector<1x10x1x16x64xf32>
    %10 = vector.shape_cast %9 : vector<1x10x1x16x64xf32> to vector<10x1x16x64xf32>
    %11 = vector.broadcast %8 : vector<1x2x1x64xf32> to vector<10x2x16x64xf32>
    %12 = vector.broadcast %10 : vector<10x1x16x64xf32> to vector<10x2x16x64xf32>
    %13 = arith.mulf %11, %12 : vector<10x2x16x64xf32>
    %14 = arith.addf %6, %13 : vector<10x2x16x64xf32>
    %c2 = arith.constant 2 : index
    %c0_18 = arith.constant 0 : index
    %c0_19 = arith.constant 0 : index
    %c0_20 = arith.constant 0 : index
    %c0_21 = arith.constant 0 : index
    %15 = vector.load %arg1[%c2, %c0_18, %c0_19, %c0_20, %c0_21] : memref<8x1x2x1x64xf32, #tpu.memory_space<vmem>>, vector<1x1x2x1x64xf32>
    %16 = vector.shape_cast %15 : vector<1x1x2x1x64xf32> to vector<1x2x1x64xf32>
    %c2_22 = arith.constant 2 : index
    %c0_23 = arith.constant 0 : index
    %c0_24 = arith.constant 0 : index
    %c0_25 = arith.constant 0 : index
    %c0_26 = arith.constant 0 : index
    %17 = vector.load %arg2[%c2_22, %c0_23, %c0_24, %c0_25, %c0_26] : memref<8x10x1x16x64xf32, #tpu.memory_space<vmem>>, vector<1x10x1x16x64xf32>
    %18 = vector.shape_cast %17 : vector<1x10x1x16x64xf32> to vector<10x1x16x64xf32>
    %19 = vector.broadcast %16 : vector<1x2x1x64xf32> to vector<10x2x16x64xf32>
    %20 = vector.broadcast %18 : vector<10x1x16x64xf32> to vector<10x2x16x64xf32>
    %21 = arith.mulf %19, %20 : vector<10x2x16x64xf32>
    %22 = arith.addf %14, %21 : vector<10x2x16x64xf32>
    %c3 = arith.constant 3 : index
    %c0_27 = arith.constant 0 : index
    %c0_28 = arith.constant 0 : index
    %c0_29 = arith.constant 0 : index
    %c0_30 = arith.constant 0 : index
    %23 = vector.load %arg1[%c3, %c0_27, %c0_28, %c0_29, %c0_30] : memref<8x1x2x1x64xf32, #tpu.memory_space<vmem>>, vector<1x1x2x1x64xf32>
    %24 = vector.shape_cast %23 : vector<1x1x2x1x64xf32> to vector<1x2x1x64xf32>
    %c3_31 = arith.constant 3 : index
    %c0_32 = arith.constant 0 : index
    %c0_33 = arith.constant 0 : index
    %c0_34 = arith.constant 0 : index
    %c0_35 = arith.constant 0 : index
    %25 = vector.load %arg2[%c3_31, %c0_32, %c0_33, %c0_34, %c0_35] : memref<8x10x1x16x64xf32, #tpu.memory_space<vmem>>, vector<1x10x1x16x64xf32>
    %26 = vector.shape_cast %25 : vector<1x10x1x16x64xf32> to vector<10x1x16x64xf32>
    %27 = vector.broadcast %24 : vector<1x2x1x64xf32> to vector<10x2x16x64xf32>
    %28 = vector.broadcast %26 : vector<10x1x16x64xf32> to vector<10x2x16x64xf32>
    %29 = arith.mulf %27, %28 : vector<10x2x16x64xf32>
    %30 = arith.addf %22, %29 : vector<10x2x16x64xf32>
    %c4 = arith.constant 4 : index
    %c0_36 = arith.constant 0 : index
    %c0_37 = arith.constant 0 : index
    %c0_38 = arith.constant 0 : index
    %c0_39 = arith.constant 0 : index
    %31 = vector.load %arg1[%c4, %c0_36, %c0_37, %c0_38, %c0_39] : memref<8x1x2x1x64xf32, #tpu.memory_space<vmem>>, vector<1x1x2x1x64xf32>
    %32 = vector.shape_cast %31 : vector<1x1x2x1x64xf32> to vector<1x2x1x64xf32>
    %c4_40 = arith.constant 4 : index
    %c0_41 = arith.constant 0 : index
    %c0_42 = arith.constant 0 : index
    %c0_43 = arith.constant 0 : index
    %c0_44 = arith.constant 0 : index
    %33 = vector.load %arg2[%c4_40, %c0_41, %c0_42, %c0_43, %c0_44] : memref<8x10x1x16x64xf32, #tpu.memory_space<vmem>>, vector<1x10x1x16x64xf32>
    %34 = vector.shape_cast %33 : vector<1x10x1x16x64xf32> to vector<10x1x16x64xf32>
    %35 = vector.broadcast %32 : vector<1x2x1x64xf32> to vector<10x2x16x64xf32>
    %36 = vector.broadcast %34 : vector<10x1x16x64xf32> to vector<10x2x16x64xf32>
    %37 = arith.mulf %35, %36 : vector<10x2x16x64xf32>
    %38 = arith.addf %30, %37 : vector<10x2x16x64xf32>
    %c5 = arith.constant 5 : index
    %c0_45 = arith.constant 0 : index
    %c0_46 = arith.constant 0 : index
    %c0_47 = arith.constant 0 : index
    %c0_48 = arith.constant 0 : index
    %39 = vector.load %arg1[%c5, %c0_45, %c0_46, %c0_47, %c0_48] : memref<8x1x2x1x64xf32, #tpu.memory_space<vmem>>, vector<1x1x2x1x64xf32>
    %40 = vector.shape_cast %39 : vector<1x1x2x1x64xf32> to vector<1x2x1x64xf32>
    %c5_49 = arith.constant 5 : index
    %c0_50 = arith.constant 0 : index
    %c0_51 = arith.constant 0 : index
    %c0_52 = arith.constant 0 : index
    %c0_53 = arith.constant 0 : index
    %41 = vector.load %arg2[%c5_49, %c0_50, %c0_51, %c0_52, %c0_53] : memref<8x10x1x16x64xf32, #tpu.memory_space<vmem>>, vector<1x10x1x16x64xf32>
    %42 = vector.shape_cast %41 : vector<1x10x1x16x64xf32> to vector<10x1x16x64xf32>
    %43 = vector.broadcast %40 : vector<1x2x1x64xf32> to vector<10x2x16x64xf32>
    %44 = vector.broadcast %42 : vector<10x1x16x64xf32> to vector<10x2x16x64xf32>
    %45 = arith.mulf %43, %44 : vector<10x2x16x64xf32>
    %46 = arith.addf %38, %45 : vector<10x2x16x64xf32>
    %c6 = arith.constant 6 : index
    %c0_54 = arith.constant 0 : index
    %c0_55 = arith.constant 0 : index
    %c0_56 = arith.constant 0 : index
    %c0_57 = arith.constant 0 : index
    %47 = vector.load %arg1[%c6, %c0_54, %c0_55, %c0_56, %c0_57] : memref<8x1x2x1x64xf32, #tpu.memory_space<vmem>>, vector<1x1x2x1x64xf32>
    %48 = vector.shape_cast %47 : vector<1x1x2x1x64xf32> to vector<1x2x1x64xf32>
    %c6_58 = arith.constant 6 : index
    %c0_59 = arith.constant 0 : index
    %c0_60 = arith.constant 0 : index
    %c0_61 = arith.constant 0 : index
    %c0_62 = arith.constant 0 : index
    %49 = vector.load %arg2[%c6_58, %c0_59, %c0_60, %c0_61, %c0_62] : memref<8x10x1x16x64xf32, #tpu.memory_space<vmem>>, vector<1x10x1x16x64xf32>
    %50 = vector.shape_cast %49 : vector<1x10x1x16x64xf32> to vector<10x1x16x64xf32>
    %51 = vector.broadcast %48 : vector<1x2x1x64xf32> to vector<10x2x16x64xf32>
    %52 = vector.broadcast %50 : vector<10x1x16x64xf32> to vector<10x2x16x64xf32>
    %53 = arith.mulf %51, %52 : vector<10x2x16x64xf32>
    %54 = arith.addf %46, %53 : vector<10x2x16x64xf32>
    %c7 = arith.constant 7 : index
    %c0_63 = arith.constant 0 : index
    %c0_64 = arith.constant 0 : index
    %c0_65 = arith.constant 0 : index
    %c0_66 = arith.constant 0 : index
    %55 = vector.load %arg1[%c7, %c0_63, %c0_64, %c0_65, %c0_66] : memref<8x1x2x1x64xf32, #tpu.memory_space<vmem>>, vector<1x1x2x1x64xf32>
    %56 = vector.shape_cast %55 : vector<1x1x2x1x64xf32> to vector<1x2x1x64xf32>
    %c7_67 = arith.constant 7 : index
    %c0_68 = arith.constant 0 : index
    %c0_69 = arith.constant 0 : index
    %c0_70 = arith.constant 0 : index
    %c0_71 = arith.constant 0 : index
    %57 = vector.load %arg2[%c7_67, %c0_68, %c0_69, %c0_70, %c0_71] : memref<8x10x1x16x64xf32, #tpu.memory_space<vmem>>, vector<1x10x1x16x64xf32>
    %58 = vector.shape_cast %57 : vector<1x10x1x16x64xf32> to vector<10x1x16x64xf32>
    %59 = vector.broadcast %56 : vector<1x2x1x64xf32> to vector<10x2x16x64xf32>
    %60 = vector.broadcast %58 : vector<10x1x16x64xf32> to vector<10x2x16x64xf32>
    %61 = arith.mulf %59, %60 : vector<10x2x16x64xf32>
    %62 = arith.addf %54, %61 : vector<10x2x16x64xf32>
    %cst = arith.constant dense<0.000000e+00> : vector<10x2x64xf32>
    %63 = vector.multi_reduction <add>, %62, %cst [2] : vector<10x2x16x64xf32> to vector<10x2x64xf32>
    %64 = vector.shape_cast %63 : vector<10x2x64xf32> to vector<10x2x1x64xf32>
    %cst_72 = arith.constant 0.000000e+00 : f32
    %65 = vector.broadcast %cst_72 : f32 to vector<10x2x1x64xf32>
    %cst_73 = arith.constant dense<0xFF800000> : vector<10x2x1xf32>
    %66 = vector.multi_reduction <maximumf>, %65, %cst_73 [3] : vector<10x2x1x64xf32> to vector<10x2x1xf32>
    %67 = vector.shape_cast %66 : vector<10x2x1xf32> to vector<10x2x1x1xf32>
    %68 = vector.broadcast %67 : vector<10x2x1x1xf32> to vector<10x2x1x64xf32>
    %69 = arith.subf %65, %68 : vector<10x2x1x64xf32>
    %70 = math.exp %69 : vector<10x2x1x64xf32>
    %cst_74 = arith.constant dense<0.000000e+00> : vector<10x2x1xf32>
    %71 = vector.multi_reduction <add>, %70, %cst_74 [3] : vector<10x2x1x64xf32> to vector<10x2x1xf32>
    %72 = vector.shape_cast %71 : vector<10x2x1xf32> to vector<10x2x1x1xf32>
    %73 = vector.broadcast %72 : vector<10x2x1x1xf32> to vector<10x2x1x64xf32>
    %74 = arith.divf %70, %73 : vector<10x2x1x64xf32>
    %75 = arith.mulf %74, %64 : vector<10x2x1x64xf32>
    %76 = arith.addf %65, %75 : vector<10x2x1x64xf32>
    %cst_75 = arith.constant dense<0xFF800000> : vector<10x2x1xf32>
    %77 = vector.multi_reduction <maximumf>, %76, %cst_75 [3] : vector<10x2x1x64xf32> to vector<10x2x1xf32>
    %78 = vector.shape_cast %77 : vector<10x2x1xf32> to vector<10x2x1x1xf32>
    %79 = vector.broadcast %78 : vector<10x2x1x1xf32> to vector<10x2x1x64xf32>
    %80 = arith.subf %76, %79 : vector<10x2x1x64xf32>
    %81 = math.exp %80 : vector<10x2x1x64xf32>
    %cst_76 = arith.constant dense<0.000000e+00> : vector<10x2x1xf32>
    %82 = vector.multi_reduction <add>, %81, %cst_76 [3] : vector<10x2x1x64xf32> to vector<10x2x1xf32>
    %83 = vector.shape_cast %82 : vector<10x2x1xf32> to vector<10x2x1x1xf32>
    %84 = vector.broadcast %83 : vector<10x2x1x1xf32> to vector<10x2x1x64xf32>
    %85 = arith.divf %81, %84 : vector<10x2x1x64xf32>
    %86 = arith.mulf %85, %64 : vector<10x2x1x64xf32>
    %87 = arith.addf %76, %86 : vector<10x2x1x64xf32>
    %cst_77 = arith.constant dense<0xFF800000> : vector<10x2x1xf32>
    %88 = vector.multi_reduction <maximumf>, %87, %cst_77 [3] : vector<10x2x1x64xf32> to vector<10x2x1xf32>
    %89 = vector.shape_cast %88 : vector<10x2x1xf32> to vector<10x2x1x1xf32>
    %90 = vector.broadcast %89 : vector<10x2x1x1xf32> to vector<10x2x1x64xf32>
    %91 = arith.subf %87, %90 : vector<10x2x1x64xf32>
    %92 = math.exp %91 : vector<10x2x1x64xf32>
    %cst_78 = arith.constant dense<0.000000e+00> : vector<10x2x1xf32>
    %93 = vector.multi_reduction <add>, %92, %cst_78 [3] : vector<10x2x1x64xf32> to vector<10x2x1xf32>
    %94 = vector.shape_cast %93 : vector<10x2x1xf32> to vector<10x2x1x1xf32>
    %95 = vector.broadcast %94 : vector<10x2x1x1xf32> to vector<10x2x1x64xf32>
    %96 = arith.divf %92, %95 : vector<10x2x1x64xf32>
    %97 = vector.broadcast %96 : vector<10x2x1x64xf32> to vector<10x2x16x64xf32>
    %98 = arith.mulf %62, %97 : vector<10x2x16x64xf32>
    %cst_79 = arith.constant dense<0.000000e+00> : vector<10x2x16xf32>
    %99 = vector.multi_reduction <add>, %98, %cst_79 [3] : vector<10x2x16x64xf32> to vector<10x2x16xf32>
    %100 = arith.mulf %99, %99 : vector<10x2x16xf32>
    %cst_80 = arith.constant dense<0.000000e+00> : vector<10x2xf32>
    %101 = vector.multi_reduction <add>, %100, %cst_80 [2] : vector<10x2x16xf32> to vector<10x2xf32>
    %102 = vector.shape_cast %101 : vector<10x2xf32> to vector<10x2x1xf32>
    %cst_81 = arith.constant 9.99999996E-13 : f32
    %103 = vector.broadcast %cst_81 : f32 to vector<10x2x1xf32>
    %104 = arith.addf %102, %103 : vector<10x2x1xf32>
    %105 = math.rsqrt %104 : vector<10x2x1xf32>
    %106 = arith.mulf %102, %105 : vector<10x2x1xf32>
    %cst_82 = arith.constant 1.000000e+00 : f32
    %107 = vector.broadcast %cst_82 : f32 to vector<10x2x1xf32>
    %108 = arith.addf %107, %102 : vector<10x2x1xf32>
    %109 = tpu.reciprocal %108 {approx = true} : vector<10x2x1xf32> -> vector<10x2x1xf32>
    %110 = arith.mulf %106, %109 : vector<10x2x1xf32>
    %111 = vector.broadcast %110 : vector<10x2x1xf32> to vector<10x2x16xf32>
    %112 = arith.mulf %99, %111 : vector<10x2x16xf32>
    %c0_83 = arith.constant 0 : index
    %c0_84 = arith.constant 0 : index
    %c0_85 = arith.constant 0 : index
    %113 = vector.load %arg3[%c0_83, %c0_84, %c0_85] : memref<10x2x16xf32, #tpu.memory_space<vmem>>, vector<10x2x16xf32>
    tpu.vector_store %arg3[%c0_83, %c0_84, %c0_85], %112 {strides = array<i32>} : memref<10x2x16xf32, #tpu.memory_space<vmem>>, vector<10x2x16xf32>,
    return
  }
  func.func @transform_0(%arg0: i32) -> (i32, i32, i32, i32, i32) {
    %c0_i32 = arith.constant 0 : i32
    %c0_i32_0 = arith.constant 0 : i32
    %c0_i32_1 = arith.constant 0 : i32
    %c0_i32_2 = arith.constant 0 : i32
    %c0_i32_3 = arith.constant 0 : i32
    %c0_i32_4 = arith.constant 0 : i32
    return %c0_i32, %c0_i32_0, %c0_i32_1, %c0_i32_2, %c0_i32_3 : i32, i32, i32, i32, i32
  }
  func.func @transform_1(%arg0: i32) -> (i32, i32, i32, i32, i32) {
    %c0_i32 = arith.constant 0 : i32
    %c0_i32_0 = arith.constant 0 : i32
    %c0_i32_1 = arith.constant 0 : i32
    %c0_i32_2 = arith.constant 0 : i32
    %c0_i32_3 = arith.constant 0 : i32
    return %c0_i32, %arg0, %c0_i32_0, %c0_i32_1, %c0_i32_2 : i32, i32, i32, i32, i32
  }
  func.func @transform_2(%arg0: i32) -> (i32, i32, i32) {
    %c0_i32 = arith.constant 0 : i32
    %c0_i32_0 = arith.constant 0 : i32
    %c0_i32_1 = arith.constant 0 : i32
    return %arg0, %c0_i32, %c0_i32_0 : i32, i32, i32
  }
}

</mosaic_0001>

<llo_original>
// kernel: tpu_custom_call.1
$region0: #{tpu_custom_call.1}
  #allocation0 [shape = 'u32[]', space=smem, size = 0x4, offset = 0x4, fixed_abs, tag = 'smem constant byte address 0x4 - core index']
  #allocation1 [shape = 'u32[144,128]{1,0:T(1,128)}', space=vmem, size = 0x12000, scoped, tag = 'internal scratch']
  %s0 = inlined_call_operand.hbm [shape: f32[8,1,2,1,64], index: 0, kind: input, shape index: {}]
  %s1 = inlined_call_operand.hbm [shape: f32[8,10,1,16,64], index: 1, kind: input, shape index: {}]
  %s2 = inlined_call_operand.hbm [shape: f32[10,2,16], index: 2, kind: output, shape index: {}]
  %s3 = sld [smem:[#allocation0]]
  $region26: #{tpu_custom_call.1} parent=0
    _
  %s5 = ssub.s32 1, %s3
  %s6 = scalar_select 0, %s5, %s3
  $region1: #{tpu_custom_call.1} parent=0
    #allocation2 [shape = 'u8[8192]{0}', space=vmem, size = 0x2000, scoped, tag = 'input window, operand 0, single buffered']
    #allocation3 [shape = 's32[1]{0}', space=sflag, size = 0x4, scoped, tag = 'scoped memory for tpu_custom_call.1']
    #allocation4 [shape = 's32[1]{0}', space=sflag, size = 0x4, scoped, tag = 'scoped memory for tpu_custom_call.1']
    #allocation5 [shape = 'u8[655360]{0}', space=vmem, size = 0xa0000, scoped, tag = 'input window, operand 1, single buffered']
    #allocation6 [shape = 's32[1]{0}', space=sflag, size = 0x4, scoped, tag = 'scoped memory for tpu_custom_call.1']
    #allocation7 [shape = 'u8[10240]{0}', space=vmem, size = 0x2800, scoped, tag = 'output window, operand 0, single buffered']
    %7 = vsyncpa [#allocation3], 0
    %8 = vsyncpa [#allocation6], 0
    %9 = vsyncpa [#allocation4], 0
    // Predicated region
    $region2: #{tpu_custom_call.1} parent=1 // pred_check
      _
    $region3: #{tpu_custom_call.1} parent=1 // pred_check_branch
      %11 = sbr.rel (0) target = $region5
    $region4: #{tpu_custom_call.1} parent=1 // pred_region
      %s13 = ssub.s32 256, 256
      %14 = vsyncadd [#allocation3], %s13
      %s15 = sshll.u32 [#allocation2], 4
      %s16 = int_to_ptr.vmem [resolvable:$true] %s15
      %21 = dma.hbm_to_vmem [thread:$0]  %s0, 256, %s16, [#allocation3], 16, 16, 1
    $region5: #{tpu_custom_call.1} parent=1 // pred_fallthru
      _
    // Predicated region
    $region6: #{tpu_custom_call.1} parent=1 // pred_check
      _
    $region7: #{tpu_custom_call.1} parent=1 // pred_check_branch
      %23 = sbr.rel (0) target = $region9
    $region8: #{tpu_custom_call.1} parent=1 // pred_region
      %s25 = ssub.s32 20480, 20480
      %26 = vsyncadd [#allocation6], %s25
      %s27 = sshll.u32 [#allocation5], 4
      %s28 = int_to_ptr.vmem [resolvable:$true] %s27
      %33 = dma.hbm_to_vmem [thread:$0]  %s1, 20480, %s28, [#allocation6], 128, 128, 8
    $region9: #{tpu_custom_call.1} parent=1 // pred_fallthru
      _
    // Predicated region
    $region10: #{tpu_custom_call.1} parent=1 // pred_check
      _
    $region11: #{tpu_custom_call.1} parent=1 // pred_check_branch
      %35 = sbr.rel (0) target = $region13
    $region12: #{tpu_custom_call.1} parent=1 // pred_region
      %36 = dma.done [#allocation3], 256
    $region13: #{tpu_custom_call.1} parent=1 // pred_fallthru
      _
    // Predicated region
    $region14: #{tpu_custom_call.1} parent=1 // pred_check
      _
    $region15: #{tpu_custom_call.1} parent=1 // pred_check_branch
      %38 = sbr.rel (0) target = $region17
    $region16: #{tpu_custom_call.1} parent=1 // pred_region
      %39 = dma.done [#allocation6], 20480
    $region17: #{tpu_custom_call.1} parent=1 // pred_fallthru
      _
    %v40 = vld [vmem:[#allocation2] sm:$0x1]
    %v41 = vld [vmem:[#allocation2 + $0x1] sm:$0x1]
    %v42 = vld [vmem:[#allocation5] sm:$0xff]
    %v43 = vld [vmem:[#allocation5 + $0x8] sm:$0xff]
    %v44 = vld [vmem:[#allocation5 + $0x10] sm:$0xff]
    %v45 = vld [vmem:[#allocation5 + $0x18] sm:$0xff]
    %v46 = vld [vmem:[#allocation5 + $0x20] sm:$0xff]
    %v47 = vld [vmem:[#allocation5 + $0x28] sm:$0xff]
    %v48 = vld [vmem:[#allocation5 + $0x30] sm:$0xff]
    %v49 = vld [vmem:[#allocation5 + $0x38] sm:$0xff]
    %v50 = vld [vmem:[#allocation5 + $0x40] sm:$0xff]
    %v51 = vld [vmem:[#allocation5 + $0x48] sm:$0xff]
    %v52 = vld [vmem:[#allocation5 + $0x50] sm:$0xff]
    %v53 = vld [vmem:[#allocation5 + $0x58] sm:$0xff]
    %v54 = vld [vmem:[#allocation5 + $0x60] sm:$0xff]
    %v55 = vld [vmem:[#allocation5 + $0x68] sm:$0xff]
    %v56 = vld [vmem:[#allocation5 + $0x70] sm:$0xff]
    %v57 = vld [vmem:[#allocation5 + $0x78] sm:$0xff]
    %v58 = vld [vmem:[#allocation5 + $0x80] sm:$0xff]
    %v59 = vld [vmem:[#allocation5 + $0x88] sm:$0xff]
    %v60 = vld [vmem:[#allocation5 + $0x90] sm:$0xff]
    %v61 = vld [vmem:[#allocation5 + $0x98] sm:$0xff]
    %v64 = vlaneseq
    %v65 = vshrl.u32 %v64, 7
    %v66 = vsub.s32 0, %v65
    %v67 = vrot.slane %v40, %v66
    %v68 = vlaneseq
    %v69 = vshrl.u32 %v68, 7
    %v70 = vsub.s32 0, %v69
    %v71 = vrot.slane %v41, %v70
    %v74 = vmul.f32 %v67, %v42
    %v75 = vmul.f32 %v67, %v43
    %v76 = vmul.f32 %v71, %v42
    %v77 = vmul.f32 %v71, %v43
    %v78 = vmul.f32 %v67, %v44
    %v79 = vmul.f32 %v67, %v45
    %v80 = vmul.f32 %v71, %v44
    %v81 = vmul.f32 %v71, %v45
    %v82 = vmul.f32 %v67, %v46
    %v83 = vmul.f32 %v67, %v47
    %v84 = vmul.f32 %v71, %v46
    %v85 = vmul.f32 %v71, %v47
    %v86 = vmul.f32 %v67, %v48
    %v87 = vmul.f32 %v67, %v49
    %v88 = vmul.f32 %v71, %v48
    %v89 = vmul.f32 %v71, %v49
    %v90 = vmul.f32 %v67, %v50
    %v91 = vmul.f32 %v67, %v51
    %v92 = vmul.f32 %v71, %v50
    %v93 = vmul.f32 %v71, %v51
    %v94 = vmul.f32 %v67, %v52
    %v95 = vmul.f32 %v67, %v53
    %v96 = vmul.f32 %v71, %v52
    %v97 = vmul.f32 %v71, %v53
    %v98 = vmul.f32 %v67, %v54
    %v99 = vmul.f32 %v67, %v55
    %v100 = vmul.f32 %v71, %v54
    %v101 = vmul.f32 %v71, %v55
    %v102 = vmul.f32 %v67, %v56
    %v103 = vmul.f32 %v67, %v57
    %v104 = vmul.f32 %v71, %v56
    %v105 = vmul.f32 %v71, %v57
    %v106 = vmul.f32 %v67, %v58
    %v107 = vmul.f32 %v67, %v59
    %v108 = vmul.f32 %v71, %v58
    %v109 = vmul.f32 %v71, %v59
    %v110 = vmul.f32 %v67, %v60
    %v111 = vmul.f32 %v67, %v61
    %v112 = vmul.f32 %v71, %v60
    %v113 = vmul.f32 %v71, %v61
    %s114 = scalar_lea.vmem [#allocation2], 2
    %v115 = vld [vmem:[%s114] sm:$0x1]
    %v116 = vld [vmem:[%s114 + $0x1] sm:$0x1]
    %s117 = scalar_lea.vmem [#allocation5], 160
    %v118 = vld [vmem:[%s117] sm:$0xff]
    %v119 = vld [vmem:[%s117 + $0x8] sm:$0xff]
    %v120 = vld [vmem:[%s117 + $0x10] sm:$0xff]
    %v121 = vld [vmem:[%s117 + $0x18] sm:$0xff]
    %v122 = vld [vmem:[%s117 + $0x20] sm:$0xff]
    %v123 = vld [vmem:[%s117 + $0x28] sm:$0xff]
    %v124 = vld [vmem:[%s117 + $0x30] sm:$0xff]
    %v125 = vld [vmem:[%s117 + $0x38] sm:$0xff]
    %v126 = vld [vmem:[%s117 + $0x40] sm:$0xff]
    %v127 = vld [vmem:[%s117 + $0x48] sm:$0xff]
    %v128 = vld [vmem:[%s117 + $0x50] sm:$0xff]
    %v129 = vld [vmem:[%s117 + $0x58] sm:$0xff]
    %v130 = vld [vmem:[%s117 + $0x60] sm:$0xff]
    %v131 = vld [vmem:[%s117 + $0x68] sm:$0xff]
    %v132 = vld [vmem:[%s117 + $0x70] sm:$0xff]
    %v133 = vld [vmem:[%s117 + $0x78] sm:$0xff]
    %v134 = vld [vmem:[%s117 + $0x80] sm:$0xff]
    %v135 = vld [vmem:[%s117 + $0x88] sm:$0xff]
    %v136 = vld [vmem:[%s117 + $0x90] sm:$0xff]
    %v137 = vld [vmem:[%s117 + $0x98] sm:$0xff]
    %v140 = vlaneseq
    %v141 = vshrl.u32 %v140, 7
    %v142 = vsub.s32 0, %v141
    %v143 = vrot.slane %v115, %v142
    %v144 = vlaneseq
    %v145 = vshrl.u32 %v144, 7
    %v146 = vsub.s32 0, %v145
    %v147 = vrot.slane %v116, %v146
    %v150 = vmul.f32 %v143, %v118
    %v151 = vmul.f32 %v143, %v119
    %v152 = vmul.f32 %v147, %v118
    %v153 = vmul.f32 %v147, %v119
    %v154 = vmul.f32 %v143, %v120
    %v155 = vmul.f32 %v143, %v121
    %v156 = vmul.f32 %v147, %v120
    %v157 = vmul.f32 %v147, %v121
    %v158 = vmul.f32 %v143, %v122
    %v159 = vmul.f32 %v143, %v123
    %v160 = vmul.f32 %v147, %v122
    %v161 = vmul.f32 %v147, %v123
    %v162 = vmul.f32 %v143, %v124
    %v163 = vmul.f32 %v143, %v125
    %v164 = vmul.f32 %v147, %v124
    %v165 = vmul.f32 %v147, %v125
    %v166 = vmul.f32 %v143, %v126
    %v167 = vmul.f32 %v143, %v127
    %v168 = vmul.f32 %v147, %v126
    %v169 = vmul.f32 %v147, %v127
    %v170 = vmul.f32 %v143, %v128
    %v171 = vmul.f32 %v143, %v129
    %v172 = vmul.f32 %v147, %v128
    %v173 = vmul.f32 %v147, %v129
    %v174 = vmul.f32 %v143, %v130
    %v175 = vmul.f32 %v143, %v131
    %v176 = vmul.f32 %v147, %v130
    %v177 = vmul.f32 %v147, %v131
    %v178 = vmul.f32 %v143, %v132
    %v179 = vmul.f32 %v143, %v133
    %v180 = vmul.f32 %v147, %v132
    %v181 = vmul.f32 %v147, %v133
    %v182 = vmul.f32 %v143, %v134
    %v183 = vmul.f32 %v143, %v135
    %v184 = vmul.f32 %v147, %v134
    %v185 = vmul.f32 %v147, %v135
    %v186 = vmul.f32 %v143, %v136
    %v187 = vmul.f32 %v143, %v137
    %v188 = vmul.f32 %v147, %v136
    %v189 = vmul.f32 %v147, %v137
    %v190 = vadd.f32 %v74, %v150
    %v191 = vadd.f32 %v75, %v151
    %v192 = vadd.f32 %v76, %v152
    %v193 = vadd.f32 %v77, %v153
    %v194 = vadd.f32 %v78, %v154
    %v195 = vadd.f32 %v79, %v155
    %v196 = vadd.f32 %v80, %v156
    %v197 = vadd.f32 %v81, %v157
    %v198 = vadd.f32 %v82, %v158
    %v199 = vadd.f32 %v83, %v159
    %v200 = vadd.f32 %v84, %v160
    %v201 = vadd.f32 %v85, %v161
    %v202 = vadd.f32 %v86, %v162
    %v203 = vadd.f32 %v87, %v163
    %v204 = vadd.f32 %v88, %v164
    %v205 = vadd.f32 %v89, %v165
    %v206 = vadd.f32 %v90, %v166
    %v207 = vadd.f32 %v91, %v167
    %v208 = vadd.f32 %v92, %v168
    %v209 = vadd.f32 %v93, %v169
    %v210 = vadd.f32 %v94, %v170
    %v211 = vadd.f32 %v95, %v171
    %v212 = vadd.f32 %v96, %v172
    %v213 = vadd.f32 %v97, %v173
    %v214 = vadd.f32 %v98, %v174
    %v215 = vadd.f32 %v99, %v175
    %v216 = vadd.f32 %v100, %v176
    %v217 = vadd.f32 %v101, %v177
    %v218 = vadd.f32 %v102, %v178
    %v219 = vadd.f32 %v103, %v179
    %v220 = vadd.f32 %v104, %v180
    %v221 = vadd.f32 %v105, %v181
    %v222 = vadd.f32 %v106, %v182
    %v223 = vadd.f32 %v107, %v183
    %v224 = vadd.f32 %v108, %v184
    %v225 = vadd.f32 %v109, %v185
    %v226 = vadd.f32 %v110, %v186
    %v227 = vadd.f32 %v111, %v187
    %v228 = vadd.f32 %v112, %v188
    %v229 = vadd.f32 %v113, %v189
    %s230 = scalar_lea.vmem [#allocation2], 4
    %v231 = vld [vmem:[%s230] sm:$0x1]
    %v232 = vld [vmem:[%s230 + $0x1] sm:$0x1]
    %s233 = scalar_lea.vmem [#allocation5], 320
    %v234 = vld [vmem:[%s233] sm:$0xff]
    %v235 = vld [vmem:[%s233 + $0x8] sm:$0xff]
    %v236 = vld [vmem:[%s233 + $0x10] sm:$0xff]
    %v237 = vld [vmem:[%s233 + $0x18] sm:$0xff]
    %v238 = vld [vmem:[%s233 + $0x20] sm:$0xff]
    %v239 = vld [vmem:[%s233 + $0x28] sm:$0xff]
    %v240 = vld [vmem:[%s233 + $0x30] sm:$0xff]
    %v241 = vld [vmem:[%s233 + $0x38] sm:$0xff]
    %v242 = vld [vmem:[%s233 + $0x40] sm:$0xff]
    %v243 = vld [vmem:[%s233 + $0x48] sm:$0xff]
    %v244 = vld [vmem:[%s233 + $0x50] sm:$0xff]
    %v245 = vld [vmem:[%s233 + $0x58] sm:$0xff]
    %v246 = vld [vmem:[%s233 + $0x60] sm:$0xff]
    %v247 = vld [vmem:[%s233 + $0x68] sm:$0xff]
    %v248 = vld [vmem:[%s233 + $0x70] sm:$0xff]
    %v249 = vld [vmem:[%s233 + $0x78] sm:$0xff]
    %v250 = vld [vmem:[%s233 + $0x80] sm:$0xff]
    %v251 = vld [vmem:[%s233 + $0x88] sm:$0xff]
    %v252 = vld [vmem:[%s233 + $0x90] sm:$0xff]
    %v253 = vld [vmem:[%s233 + $0x98] sm:$0xff]
    %v256 = vlaneseq
    %v257 = vshrl.u32 %v256, 7
    %v258 = vsub.s32 0, %v257
    %v259 = vrot.slane %v231, %v258
    %v260 = vlaneseq
    %v261 = vshrl.u32 %v260, 7
    %v262 = vsub.s32 0, %v261
    %v263 = vrot.slane %v232, %v262
    %v266 = vmul.f32 %v259, %v234
    %v267 = vmul.f32 %v259, %v235
    %v268 = vmul.f32 %v263, %v234
    %v269 = vmul.f32 %v263, %v235
    %v270 = vmul.f32 %v259, %v236
    %v271 = vmul.f32 %v259, %v237
    %v272 = vmul.f32 %v263, %v236
    %v273 = vmul.f32 %v263, %v237
    %v274 = vmul.f32 %v259, %v238
    %v275 = vmul.f32 %v259, %v239
    %v276 = vmul.f32 %v263, %v238
    %v277 = vmul.f32 %v263, %v239
    %v278 = vmul.f32 %v259, %v240
    %v279 = vmul.f32 %v259, %v241
    %v280 = vmul.f32 %v263, %v240
    %v281 = vmul.f32 %v263, %v241
    %v282 = vmul.f32 %v259, %v242
    %v283 = vmul.f32 %v259, %v243
    %v284 = vmul.f32 %v263, %v242
    %v285 = vmul.f32 %v263, %v243
    %v286 = vmul.f32 %v259, %v244
    %v287 = vmul.f32 %v259, %v245
    %v288 = vmul.f32 %v263, %v244
    %v289 = vmul.f32 %v263, %v245
    %v290 = vmul.f32 %v259, %v246
    %v291 = vmul.f32 %v259, %v247
    %v292 = vmul.f32 %v263, %v246
    %v293 = vmul.f32 %v263, %v247
    %v294 = vmul.f32 %v259, %v248
    %v295 = vmul.f32 %v259, %v249
    %v296 = vmul.f32 %v263, %v248
    %v297 = vmul.f32 %v263, %v249
    %v298 = vmul.f32 %v259, %v250
    %v299 = vmul.f32 %v259, %v251
    %v300 = vmul.f32 %v263, %v250
    %v301 = vmul.f32 %v263, %v251
    %v302 = vmul.f32 %v259, %v252
    %v303 = vmul.f32 %v259, %v253
    %v304 = vmul.f32 %v263, %v252
    %v305 = vmul.f32 %v263, %v253
    %v306 = vadd.f32 %v190, %v266
    %v307 = vadd.f32 %v191, %v267
    %v308 = vadd.f32 %v192, %v268
    %v309 = vadd.f32 %v193, %v269
    %v310 = vadd.f32 %v194, %v270
    %v311 = vadd.f32 %v195, %v271
    %v312 = vadd.f32 %v196, %v272
    %v313 = vadd.f32 %v197, %v273
    %v314 = vadd.f32 %v198, %v274
    %v315 = vadd.f32 %v199, %v275
    %v316 = vadd.f32 %v200, %v276
    %v317 = vadd.f32 %v201, %v277
    %v318 = vadd.f32 %v202, %v278
    %v319 = vadd.f32 %v203, %v279
    %v320 = vadd.f32 %v204, %v280
    %v321 = vadd.f32 %v205, %v281
    %v322 = vadd.f32 %v206, %v282
    %v323 = vadd.f32 %v207, %v283
    %v324 = vadd.f32 %v208, %v284
    %v325 = vadd.f32 %v209, %v285
    %v326 = vadd.f32 %v210, %v286
    %v327 = vadd.f32 %v211, %v287
    %v328 = vadd.f32 %v212, %v288
    %v329 = vadd.f32 %v213, %v289
    %v330 = vadd.f32 %v214, %v290
    %v331 = vadd.f32 %v215, %v291
    %v332 = vadd.f32 %v216, %v292
    %v333 = vadd.f32 %v217, %v293
    %v334 = vadd.f32 %v218, %v294
    %v335 = vadd.f32 %v219, %v295
    %v336 = vadd.f32 %v220, %v296
    %v337 = vadd.f32 %v221, %v297
    %v338 = vadd.f32 %v222, %v298
    %v339 = vadd.f32 %v223, %v299
    %v340 = vadd.f32 %v224, %v300
    %v341 = vadd.f32 %v225, %v301
    %v342 = vadd.f32 %v226, %v302
    %v343 = vadd.f32 %v227, %v303
    %v344 = vadd.f32 %v228, %v304
    %v345 = vadd.f32 %v229, %v305
    %s346 = scalar_lea.vmem [#allocation2], 6
    %v347 = vld [vmem:[%s346] sm:$0x1]
    %v348 = vld [vmem:[%s346 + $0x1] sm:$0x1]
    %s349 = scalar_lea.vmem [#allocation5], 480
    %v350 = vld [vmem:[%s349] sm:$0xff]
    %v351 = vld [vmem:[%s349 + $0x8] sm:$0xff]
    %v352 = vld [vmem:[%s349 + $0x10] sm:$0xff]
    %v353 = vld [vmem:[%s349 + $0x18] sm:$0xff]
    %v354 = vld [vmem:[%s349 + $0x20] sm:$0xff]
    %v355 = vld [vmem:[%s349 + $0x28] sm:$0xff]
    %v356 = vld [vmem:[%s349 + $0x30] sm:$0xff]
    %v357 = vld [vmem:[%s349 + $0x38] sm:$0xff]
    %v358 = vld [vmem:[%s349 + $0x40] sm:$0xff]
    %v359 = vld [vmem:[%s349 + $0x48] sm:$0xff]
    %v360 = vld [vmem:[%s349 + $0x50] sm:$0xff]
    %v361 = vld [vmem:[%s349 + $0x58] sm:$0xff]
    %v362 = vld [vmem:[%s349 + $0x60] sm:$0xff]
    %v363 = vld [vmem:[%s349 + $0x68] sm:$0xff]
    %v364 = vld [vmem:[%s349 + $0x70] sm:$0xff]
    %v365 = vld [vmem:[%s349 + $0x78] sm:$0xff]
    %v366 = vld [vmem:[%s349 + $0x80] sm:$0xff]
    %v367 = vld [vmem:[%s349 + $0x88] sm:$0xff]
    %v368 = vld [vmem:[%s349 + $0x90] sm:$0xff]
    %v369 = vld [vmem:[%s349 + $0x98] sm:$0xff]
    %v372 = vlaneseq
    %v373 = vshrl.u32 %v372, 7
    %v374 = vsub.s32 0, %v373
    %v375 = vrot.slane %v347, %v374
    %v376 = vlaneseq
    %v377 = vshrl.u32 %v376, 7
    %v378 = vsub.s32 0, %v377
    %v379 = vrot.slane %v348, %v378
    %v382 = vmul.f32 %v375, %v350
    %v383 = vmul.f32 %v375, %v351
    %v384 = vmul.f32 %v379, %v350
    %v385 = vmul.f32 %v379, %v351
    %v386 = vmul.f32 %v375, %v352
    %v387 = vmul.f32 %v375, %v353
    %v388 = vmul.f32 %v379, %v352
    %v389 = vmul.f32 %v379, %v353
    %v390 = vmul.f32 %v375, %v354
    %v391 = vmul.f32 %v375, %v355
    %v392 = vmul.f32 %v379, %v354
    %v393 = vmul.f32 %v379, %v355
    %v394 = vmul.f32 %v375, %v356
    %v395 = vmul.f32 %v375, %v357
    %v396 = vmul.f32 %v379, %v356
    %v397 = vmul.f32 %v379, %v357
    %v398 = vmul.f32 %v375, %v358
    %v399 = vmul.f32 %v375, %v359
    %v400 = vmul.f32 %v379, %v358
    %v401 = vmul.f32 %v379, %v359
    %v402 = vmul.f32 %v375, %v360
    %v403 = vmul.f32 %v375, %v361
    %v404 = vmul.f32 %v379, %v360
    %v405 = vmul.f32 %v379, %v361
    %v406 = vmul.f32 %v375, %v362
    %v407 = vmul.f32 %v375, %v363
    %v408 = vmul.f32 %v379, %v362
    %v409 = vmul.f32 %v379, %v363
    %v410 = vmul.f32 %v375, %v364
    %v411 = vmul.f32 %v375, %v365
    %v412 = vmul.f32 %v379, %v364
    %v413 = vmul.f32 %v379, %v365
    %v414 = vmul.f32 %v375, %v366
    %v415 = vmul.f32 %v375, %v367
    %v416 = vmul.f32 %v379, %v366
    %v417 = vmul.f32 %v379, %v367
    %v418 = vmul.f32 %v375, %v368
    %v419 = vmul.f32 %v375, %v369
    %v420 = vmul.f32 %v379, %v368
    %v421 = vmul.f32 %v379, %v369
    %v422 = vadd.f32 %v306, %v382
    %v423 = vadd.f32 %v307, %v383
    %v424 = vadd.f32 %v308, %v384
    %v425 = vadd.f32 %v309, %v385
    %v426 = vadd.f32 %v310, %v386
    %v427 = vadd.f32 %v311, %v387
    %v428 = vadd.f32 %v312, %v388
    %v429 = vadd.f32 %v313, %v389
    %v430 = vadd.f32 %v314, %v390
    %v431 = vadd.f32 %v315, %v391
    %v432 = vadd.f32 %v316, %v392
    %v433 = vadd.f32 %v317, %v393
    %v434 = vadd.f32 %v318, %v394
    %v435 = vadd.f32 %v319, %v395
    %v436 = vadd.f32 %v320, %v396
    %v437 = vadd.f32 %v321, %v397
    %v438 = vadd.f32 %v322, %v398
    %v439 = vadd.f32 %v323, %v399
    %v440 = vadd.f32 %v324, %v400
    %v441 = vadd.f32 %v325, %v401
    %v442 = vadd.f32 %v326, %v402
    %v443 = vadd.f32 %v327, %v403
    %v444 = vadd.f32 %v328, %v404
    %v445 = vadd.f32 %v329, %v405
    %v446 = vadd.f32 %v330, %v406
    %v447 = vadd.f32 %v331, %v407
    %v448 = vadd.f32 %v332, %v408
    %v449 = vadd.f32 %v333, %v409
    %v450 = vadd.f32 %v334, %v410
    %v451 = vadd.f32 %v335, %v411
    %v452 = vadd.f32 %v336, %v412
    %v453 = vadd.f32 %v337, %v413
    %v454 = vadd.f32 %v338, %v414
    %v455 = vadd.f32 %v339, %v415
    %v456 = vadd.f32 %v340, %v416
    %v457 = vadd.f32 %v341, %v417
    %v458 = vadd.f32 %v342, %v418
    %v459 = vadd.f32 %v343, %v419
    %v460 = vadd.f32 %v344, %v420
    %v461 = vadd.f32 %v345, %v421
    %s462 = scalar_lea.vmem [#allocation2], 8
    %v463 = vld [vmem:[%s462] sm:$0x1]
    %v464 = vld [vmem:[%s462 + $0x1] sm:$0x1]
    %s465 = scalar_lea.vmem [#allocation5], 640
    %v466 = vld [vmem:[%s465] sm:$0xff]
    %v467 = vld [vmem:[%s465 + $0x8] sm:$0xff]
    %v468 = vld [vmem:[%s465 + $0x10] sm:$0xff]
    %v469 = vld [vmem:[%s465 + $0x18] sm:$0xff]
    %v470 = vld [vmem:[%s465 + $0x20] sm:$0xff]
    %v471 = vld [vmem:[%s465 + $0x28] sm:$0xff]
    %v472 = vld [vmem:[%s465 + $0x30] sm:$0xff]
    %v473 = vld [vmem:[%s465 + $0x38] sm:$0xff]
    %v474 = vld [vmem:[%s465 + $0x40] sm:$0xff]
    %v475 = vld [vmem:[%s465 + $0x48] sm:$0xff]
    %v476 = vld [vmem:[%s465 + $0x50] sm:$0xff]
    %v477 = vld [vmem:[%s465 + $0x58] sm:$0xff]
    %v478 = vld [vmem:[%s465 + $0x60] sm:$0xff]
    %v479 = vld [vmem:[%s465 + $0x68] sm:$0xff]
    %v480 = vld [vmem:[%s465 + $0x70] sm:$0xff]
    %v481 = vld [vmem:[%s465 + $0x78] sm:$0xff]
    %v482 = vld [vmem:[%s465 + $0x80] sm:$0xff]
    %v483 = vld [vmem:[%s465 + $0x88] sm:$0xff]
    %v484 = vld [vmem:[%s465 + $0x90] sm:$0xff]
    %v485 = vld [vmem:[%s465 + $0x98] sm:$0xff]
    %v488 = vlaneseq
    %v489 = vshrl.u32 %v488, 7
    %v490 = vsub.s32 0, %v489
    %v491 = vrot.slane %v463, %v490
    %v492 = vlaneseq
    %v493 = vshrl.u32 %v492, 7
    %v494 = vsub.s32 0, %v493
    %v495 = vrot.slane %v464, %v494
    %v498 = vmul.f32 %v491, %v466
    %v499 = vmul.f32 %v491, %v467
    %v500 = vmul.f32 %v495, %v466
    %v501 = vmul.f32 %v495, %v467
    %v502 = vmul.f32 %v491, %v468
    %v503 = vmul.f32 %v491, %v469
    %v504 = vmul.f32 %v495, %v468
    %v505 = vmul.f32 %v495, %v469
    %v506 = vmul.f32 %v491, %v470
    %v507 = vmul.f32 %v491, %v471
    %v508 = vmul.f32 %v495, %v470
    %v509 = vmul.f32 %v495, %v471
    %v510 = vmul.f32 %v491, %v472
    %v511 = vmul.f32 %v491, %v473
    %v512 = vmul.f32 %v495, %v472
    %v513 = vmul.f32 %v495, %v473
    %v514 = vmul.f32 %v491, %v474
    %v515 = vmul.f32 %v491, %v475
    %v516 = vmul.f32 %v495, %v474
    %v517 = vmul.f32 %v495, %v475
    %v518 = vmul.f32 %v491, %v476
    %v519 = vmul.f32 %v491, %v477
    %v520 = vmul.f32 %v495, %v476
    %v521 = vmul.f32 %v495, %v477
    %v522 = vmul.f32 %v491, %v478
    %v523 = vmul.f32 %v491, %v479
    %v524 = vmul.f32 %v495, %v478
    %v525 = vmul.f32 %v495, %v479
    %v526 = vmul.f32 %v491, %v480
    %v527 = vmul.f32 %v491, %v481
    %v528 = vmul.f32 %v495, %v480
    %v529 = vmul.f32 %v495, %v481
    %v530 = vmul.f32 %v491, %v482
    %v531 = vmul.f32 %v491, %v483
    %v532 = vmul.f32 %v495, %v482
    %v533 = vmul.f32 %v495, %v483
    %v534 = vmul.f32 %v491, %v484
    %v535 = vmul.f32 %v491, %v485
    %v536 = vmul.f32 %v495, %v484
    %v537 = vmul.f32 %v495, %v485
    %v538 = vadd.f32 %v422, %v498
    %v539 = vadd.f32 %v423, %v499
    %v540 = vadd.f32 %v424, %v500
    %v541 = vadd.f32 %v425, %v501
    %v542 = vadd.f32 %v426, %v502
    %v543 = vadd.f32 %v427, %v503
    %v544 = vadd.f32 %v428, %v504
    %v545 = vadd.f32 %v429, %v505
    %v546 = vadd.f32 %v430, %v506
    %v547 = vadd.f32 %v431, %v507
    %v548 = vadd.f32 %v432, %v508
    %v549 = vadd.f32 %v433, %v509
    %v550 = vadd.f32 %v434, %v510
    %v551 = vadd.f32 %v435, %v511
    %v552 = vadd.f32 %v436, %v512
    %v553 = vadd.f32 %v437, %v513
    %v554 = vadd.f32 %v438, %v514
    %v555 = vadd.f32 %v439, %v515
    %v556 = vadd.f32 %v440, %v516
    %v557 = vadd.f32 %v441, %v517
    %v558 = vadd.f32 %v442, %v518
    %v559 = vadd.f32 %v443, %v519
    %v560 = vadd.f32 %v444, %v520
    %v561 = vadd.f32 %v445, %v521
    %v562 = vadd.f32 %v446, %v522
    %v563 = vadd.f32 %v447, %v523
    %v564 = vadd.f32 %v448, %v524
    %v565 = vadd.f32 %v449, %v525
    %v566 = vadd.f32 %v450, %v526
    %v567 = vadd.f32 %v451, %v527
    %v568 = vadd.f32 %v452, %v528
    %v569 = vadd.f32 %v453, %v529
    %v570 = vadd.f32 %v454, %v530
    %v571 = vadd.f32 %v455, %v531
    %v572 = vadd.f32 %v456, %v532
    %v573 = vadd.f32 %v457, %v533
    %v574 = vadd.f32 %v458, %v534
    %v575 = vadd.f32 %v459, %v535
    %v576 = vadd.f32 %v460, %v536
    %v577 = vadd.f32 %v461, %v537
    %s578 = scalar_lea.vmem [#allocation2], 10
    %v579 = vld [vmem:[%s578] sm:$0x1]
    %v580 = vld [vmem:[%s578 + $0x1] sm:$0x1]
    %s581 = scalar_lea.vmem [#allocation5], 800
    %v582 = vld [vmem:[%s581] sm:$0xff]
    %v583 = vld [vmem:[%s581 + $0x8] sm:$0xff]
    %v584 = vld [vmem:[%s581 + $0x10] sm:$0xff]
    %v585 = vld [vmem:[%s581 + $0x18] sm:$0xff]
    %v586 = vld [vmem:[%s581 + $0x20] sm:$0xff]
    %v587 = vld [vmem:[%s581 + $0x28] sm:$0xff]
    %v588 = vld [vmem:[%s581 + $0x30] sm:$0xff]
    %v589 = vld [vmem:[%s581 + $0x38] sm:$0xff]
    %v590 = vld [vmem:[%s581 + $0x40] sm:$0xff]
    %v591 = vld [vmem:[%s581 + $0x48] sm:$0xff]
    %v592 = vld [vmem:[%s581 + $0x50] sm:$0xff]
    %v593 = vld [vmem:[%s581 + $0x58] sm:$0xff]
    %v594 = vld [vmem:[%s581 + $0x60] sm:$0xff]
    %v595 = vld [vmem:[%s581 + $0x68] sm:$0xff]
    %v596 = vld [vmem:[%s581 + $0x70] sm:$0xff]
    %v597 = vld [vmem:[%s581 + $0x78] sm:$0xff]
    %v598 = vld [vmem:[%s581 + $0x80] sm:$0xff]
    %v599 = vld [vmem:[%s581 + $0x88] sm:$0xff]
    %v600 = vld [vmem:[%s581 + $0x90] sm:$0xff]
    %v601 = vld [vmem:[%s581 + $0x98] sm:$0xff]
    %v604 = vlaneseq
    %v605 = vshrl.u32 %v604, 7
    %v606 = vsub.s32 0, %v605
    %v607 = vrot.slane %v579, %v606
    %v608 = vlaneseq
    %v609 = vshrl.u32 %v608, 7
    %v610 = vsub.s32 0, %v609
    %v611 = vrot.slane %v580, %v610
    %v614 = vmul.f32 %v607, %v582
    %v615 = vmul.f32 %v607, %v583
    %v616 = vmul.f32 %v611, %v582
    %v617 = vmul.f32 %v611, %v583
    %v618 = vmul.f32 %v607, %v584
    %v619 = vmul.f32 %v607, %v585
    %v620 = vmul.f32 %v611, %v584
    %v621 = vmul.f32 %v611, %v585
    %v622 = vmul.f32 %v607, %v586
    %v623 = vmul.f32 %v607, %v587
    %v624 = vmul.f32 %v611, %v586
    %v625 = vmul.f32 %v611, %v587
    %v626 = vmul.f32 %v607, %v588
    %v627 = vmul.f32 %v607, %v589
    %v628 = vmul.f32 %v611, %v588
    %v629 = vmul.f32 %v611, %v589
    %v630 = vmul.f32 %v607, %v590
    %v631 = vmul.f32 %v607, %v591
    %v632 = vmul.f32 %v611, %v590
    %v633 = vmul.f32 %v611, %v591
    %v634 = vmul.f32 %v607, %v592
    %v635 = vmul.f32 %v607, %v593
    %v636 = vmul.f32 %v611, %v592
    %v637 = vmul.f32 %v611, %v593
    %v638 = vmul.f32 %v607, %v594
    %v639 = vmul.f32 %v607, %v595
    %v640 = vmul.f32 %v611, %v594
    %v641 = vmul.f32 %v611, %v595
    %v642 = vmul.f32 %v607, %v596
    %v643 = vmul.f32 %v607, %v597
    %v644 = vmul.f32 %v611, %v596
    %v645 = vmul.f32 %v611, %v597
    %v646 = vmul.f32 %v607, %v598
    %v647 = vmul.f32 %v607, %v599
    %v648 = vmul.f32 %v611, %v598
    %v649 = vmul.f32 %v611, %v599
    %v650 = vmul.f32 %v607, %v600
    %v651 = vmul.f32 %v607, %v601
    %v652 = vmul.f32 %v611, %v600
    %v653 = vmul.f32 %v611, %v601
    %v654 = vadd.f32 %v538, %v614
    %v655 = vadd.f32 %v539, %v615
    %v656 = vadd.f32 %v540, %v616
    %v657 = vadd.f32 %v541, %v617
    %v658 = vadd.f32 %v542, %v618
    %v659 = vadd.f32 %v543, %v619
    %v660 = vadd.f32 %v544, %v620
    %v661 = vadd.f32 %v545, %v621
    %v662 = vadd.f32 %v546, %v622
    %v663 = vadd.f32 %v547, %v623
    %v664 = vadd.f32 %v548, %v624
    %v665 = vadd.f32 %v549, %v625
    %v666 = vadd.f32 %v550, %v626
    %v667 = vadd.f32 %v551, %v627
    %v668 = vadd.f32 %v552, %v628
    %v669 = vadd.f32 %v553, %v629
    %v670 = vadd.f32 %v554, %v630
    %v671 = vadd.f32 %v555, %v631
    %v672 = vadd.f32 %v556, %v632
    %v673 = vadd.f32 %v557, %v633
    %v674 = vadd.f32 %v558, %v634
    %v675 = vadd.f32 %v559, %v635
    %v676 = vadd.f32 %v560, %v636
    %v677 = vadd.f32 %v561, %v637
    %v678 = vadd.f32 %v562, %v638
    %v679 = vadd.f32 %v563, %v639
    %v680 = vadd.f32 %v564, %v640
    %v681 = vadd.f32 %v565, %v641
    %v682 = vadd.f32 %v566, %v642
    %v683 = vadd.f32 %v567, %v643
    %v684 = vadd.f32 %v568, %v644
    %v685 = vadd.f32 %v569, %v645
    %v686 = vadd.f32 %v570, %v646
    %v687 = vadd.f32 %v571, %v647
    %v688 = vadd.f32 %v572, %v648
    %v689 = vadd.f32 %v573, %v649
    %v690 = vadd.f32 %v574, %v650
    %v691 = vadd.f32 %v575, %v651
    %v692 = vadd.f32 %v576, %v652
    %v693 = vadd.f32 %v577, %v653
    %s694 = scalar_lea.vmem [#allocation2], 12
    %v695 = vld [vmem:[%s694] sm:$0x1]
    %v696 = vld [vmem:[%s694 + $0x1] sm:$0x1]
    %s697 = scalar_lea.vmem [#allocation5], 960
    %v698 = vld [vmem:[%s697] sm:$0xff]
    %v699 = vld [vmem:[%s697 + $0x8] sm:$0xff]
    %v700 = vld [vmem:[%s697 + $0x10] sm:$0xff]
    %v701 = vld [vmem:[%s697 + $0x18] sm:$0xff]
    %v702 = vld [vmem:[%s697 + $0x20] sm:$0xff]
    %v703 = vld [vmem:[%s697 + $0x28] sm:$0xff]
    %v704 = vld [vmem:[%s697 + $0x30] sm:$0xff]
    %v705 = vld [vmem:[%s697 + $0x38] sm:$0xff]
    %v706 = vld [vmem:[%s697 + $0x40] sm:$0xff]
    %v707 = vld [vmem:[%s697 + $0x48] sm:$0xff]
    %v708 = vld [vmem:[%s697 + $0x50] sm:$0xff]
    %v709 = vld [vmem:[%s697 + $0x58] sm:$0xff]
    %v710 = vld [vmem:[%s697 + $0x60] sm:$0xff]
    %v711 = vld [vmem:[%s697 + $0x68] sm:$0xff]
    %v712 = vld [vmem:[%s697 + $0x70] sm:$0xff]
    %v713 = vld [vmem:[%s697 + $0x78] sm:$0xff]
    %v714 = vld [vmem:[%s697 + $0x80] sm:$0xff]
    %v715 = vld [vmem:[%s697 + $0x88] sm:$0xff]
    %v716 = vld [vmem:[%s697 + $0x90] sm:$0xff]
    %v717 = vld [vmem:[%s697 + $0x98] sm:$0xff]
    %v720 = vlaneseq
    %v721 = vshrl.u32 %v720, 7
    %v722 = vsub.s32 0, %v721
    %v723 = vrot.slane %v695, %v722
    %v724 = vlaneseq
    %v725 = vshrl.u32 %v724, 7
    %v726 = vsub.s32 0, %v725
    %v727 = vrot.slane %v696, %v726
    %v730 = vmul.f32 %v723, %v698
    %v731 = vmul.f32 %v723, %v699
    %v732 = vmul.f32 %v727, %v698
    %v733 = vmul.f32 %v727, %v699
    %v734 = vmul.f32 %v723, %v700
    %v735 = vmul.f32 %v723, %v701
    %v736 = vmul.f32 %v727, %v700
    %v737 = vmul.f32 %v727, %v701
    %v738 = vmul.f32 %v723, %v702
    %v739 = vmul.f32 %v723, %v703
    %v740 = vmul.f32 %v727, %v702
    %v741 = vmul.f32 %v727, %v703
    %v742 = vmul.f32 %v723, %v704
    %v743 = vmul.f32 %v723, %v705
    %v744 = vmul.f32 %v727, %v704
    %v745 = vmul.f32 %v727, %v705
    %v746 = vmul.f32 %v723, %v706
    %v747 = vmul.f32 %v723, %v707
    %v748 = vmul.f32 %v727, %v706
    %v749 = vmul.f32 %v727, %v707
    %v750 = vmul.f32 %v723, %v708
    %v751 = vmul.f32 %v723, %v709
    %v752 = vmul.f32 %v727, %v708
    %v753 = vmul.f32 %v727, %v709
    %v754 = vmul.f32 %v723, %v710
    %v755 = vmul.f32 %v723, %v711
    %v756 = vmul.f32 %v727, %v710
    %v757 = vmul.f32 %v727, %v711
    %v758 = vmul.f32 %v723, %v712
    %v759 = vmul.f32 %v723, %v713
    %v760 = vmul.f32 %v727, %v712
    %v761 = vmul.f32 %v727, %v713
    %v762 = vmul.f32 %v723, %v714
    %v763 = vmul.f32 %v723, %v715
    %v764 = vmul.f32 %v727, %v714
    %v765 = vmul.f32 %v727, %v715
    %v766 = vmul.f32 %v723, %v716
    %v767 = vmul.f32 %v723, %v717
    %v768 = vmul.f32 %v727, %v716
    %v769 = vmul.f32 %v727, %v717
    %v770 = vadd.f32 %v654, %v730
    %v771 = vadd.f32 %v655, %v731
    %v772 = vadd.f32 %v656, %v732
    %v773 = vadd.f32 %v657, %v733
    %v774 = vadd.f32 %v658, %v734
    %v775 = vadd.f32 %v659, %v735
    %v776 = vadd.f32 %v660, %v736
    %v777 = vadd.f32 %v661, %v737
    %v778 = vadd.f32 %v662, %v738
    %v779 = vadd.f32 %v663, %v739
    %v780 = vadd.f32 %v664, %v740
    %v781 = vadd.f32 %v665, %v741
    %v782 = vadd.f32 %v666, %v742
    %v783 = vadd.f32 %v667, %v743
    %v784 = vadd.f32 %v668, %v744
    %v785 = vadd.f32 %v669, %v745
    %v786 = vadd.f32 %v670, %v746
    %v787 = vadd.f32 %v671, %v747
    %v788 = vadd.f32 %v672, %v748
    %v789 = vadd.f32 %v673, %v749
    %v790 = vadd.f32 %v674, %v750
    %v791 = vadd.f32 %v675, %v751
    %v792 = vadd.f32 %v676, %v752
    %v793 = vadd.f32 %v677, %v753
    %v794 = vadd.f32 %v678, %v754
    %v795 = vadd.f32 %v679, %v755
    %v796 = vadd.f32 %v680, %v756
    %v797 = vadd.f32 %v681, %v757
    %v798 = vadd.f32 %v682, %v758
    %v799 = vadd.f32 %v683, %v759
    %v800 = vadd.f32 %v684, %v760
    %v801 = vadd.f32 %v685, %v761
    %v802 = vadd.f32 %v686, %v762
    %v803 = vadd.f32 %v687, %v763
    %v804 = vadd.f32 %v688, %v764
    %v805 = vadd.f32 %v689, %v765
    %v806 = vadd.f32 %v690, %v766
    %v807 = vadd.f32 %v691, %v767
    %v808 = vadd.f32 %v692, %v768
    %v809 = vadd.f32 %v693, %v769
    %s810 = scalar_lea.vmem [#allocation2], 14
    %v811 = vld [vmem:[%s810] sm:$0x1]
    %v812 = vld [vmem:[%s810 + $0x1] sm:$0x1]
    %s813 = scalar_lea.vmem [#allocation5], 1120
    %v814 = vld [vmem:[%s813] sm:$0xff]
    %v815 = vld [vmem:[%s813 + $0x8] sm:$0xff]
    %v816 = vld [vmem:[%s813 + $0x10] sm:$0xff]
    %v817 = vld [vmem:[%s813 + $0x18] sm:$0xff]
    %v818 = vld [vmem:[%s813 + $0x20] sm:$0xff]
    %v819 = vld [vmem:[%s813 + $0x28] sm:$0xff]
    %v820 = vld [vmem:[%s813 + $0x30] sm:$0xff]
    %v821 = vld [vmem:[%s813 + $0x38] sm:$0xff]
    %v822 = vld [vmem:[%s813 + $0x40] sm:$0xff]
    %v823 = vld [vmem:[%s813 + $0x48] sm:$0xff]
    %v824 = vld [vmem:[%s813 + $0x50] sm:$0xff]
    %v825 = vld [vmem:[%s813 + $0x58] sm:$0xff]
    %v826 = vld [vmem:[%s813 + $0x60] sm:$0xff]
    %v827 = vld [vmem:[%s813 + $0x68] sm:$0xff]
    %v828 = vld [vmem:[%s813 + $0x70] sm:$0xff]
    %v829 = vld [vmem:[%s813 + $0x78] sm:$0xff]
    %v830 = vld [vmem:[%s813 + $0x80] sm:$0xff]
    %v831 = vld [vmem:[%s813 + $0x88] sm:$0xff]
    %v832 = vld [vmem:[%s813 + $0x90] sm:$0xff]
    %v833 = vld [vmem:[%s813 + $0x98] sm:$0xff]
    %v836 = vlaneseq
    %v837 = vshrl.u32 %v836, 7
    %v838 = vsub.s32 0, %v837
    %v839 = vrot.slane %v811, %v838
    %v840 = vlaneseq
    %v841 = vshrl.u32 %v840, 7
    %v842 = vsub.s32 0, %v841
    %v843 = vrot.slane %v812, %v842
    %v846 = vmul.f32 %v839, %v814
    %v847 = vmul.f32 %v839, %v815
    %v848 = vmul.f32 %v843, %v814
    %v849 = vmul.f32 %v843, %v815
    %v850 = vmul.f32 %v839, %v816
    %v851 = vmul.f32 %v839, %v817
    %v852 = vmul.f32 %v843, %v816
    %v853 = vmul.f32 %v843, %v817
    %v854 = vmul.f32 %v839, %v818
    %v855 = vmul.f32 %v839, %v819
    %v856 = vmul.f32 %v843, %v818
    %v857 = vmul.f32 %v843, %v819
    %v858 = vmul.f32 %v839, %v820
    %v859 = vmul.f32 %v839, %v821
    %v860 = vmul.f32 %v843, %v820
    %v861 = vmul.f32 %v843, %v821
    %v862 = vmul.f32 %v839, %v822
    %v863 = vmul.f32 %v839, %v823
    %v864 = vmul.f32 %v843, %v822
    %v865 = vmul.f32 %v843, %v823
    %v866 = vmul.f32 %v839, %v824
    %v867 = vmul.f32 %v839, %v825
    %v868 = vmul.f32 %v843, %v824
    %v869 = vmul.f32 %v843, %v825
    %v870 = vmul.f32 %v839, %v826
    %v871 = vmul.f32 %v839, %v827
    %v872 = vmul.f32 %v843, %v826
    %v873 = vmul.f32 %v843, %v827
    %v874 = vmul.f32 %v839, %v828
    %v875 = vmul.f32 %v839, %v829
    %v876 = vmul.f32 %v843, %v828
    %v877 = vmul.f32 %v843, %v829
    %v878 = vmul.f32 %v839, %v830
    %v879 = vmul.f32 %v839, %v831
    %v880 = vmul.f32 %v843, %v830
    %v881 = vmul.f32 %v843, %v831
    %v882 = vmul.f32 %v839, %v832
    %v883 = vmul.f32 %v839, %v833
    %v884 = vmul.f32 %v843, %v832
    %v885 = vmul.f32 %v843, %v833
    %v886 = vadd.f32 %v770, %v846
    %v887 = vadd.f32 %v771, %v847
    %v888 = vadd.f32 %v772, %v848
    %v889 = vadd.f32 %v773, %v849
    %v890 = vadd.f32 %v774, %v850
    %v891 = vadd.f32 %v775, %v851
    %v892 = vadd.f32 %v776, %v852
    %v893 = vadd.f32 %v777, %v853
    %v894 = vadd.f32 %v778, %v854
    %v895 = vadd.f32 %v779, %v855
    %v896 = vadd.f32 %v780, %v856
    %v897 = vadd.f32 %v781, %v857
    %v898 = vadd.f32 %v782, %v858
    %v899 = vadd.f32 %v783, %v859
    %v900 = vadd.f32 %v784, %v860
    %v901 = vadd.f32 %v785, %v861
    %v902 = vadd.f32 %v786, %v862
    %v903 = vadd.f32 %v787, %v863
    %v904 = vadd.f32 %v788, %v864
    %v905 = vadd.f32 %v789, %v865
    %v906 = vadd.f32 %v790, %v866
    %v907 = vadd.f32 %v791, %v867
    %v908 = vadd.f32 %v792, %v868
    %v909 = vadd.f32 %v793, %v869
    %v910 = vadd.f32 %v794, %v870
    %v911 = vadd.f32 %v795, %v871
    %v912 = vadd.f32 %v796, %v872
    %v913 = vadd.f32 %v797, %v873
    %v914 = vadd.f32 %v798, %v874
    %v915 = vadd.f32 %v799, %v875
    %v916 = vadd.f32 %v800, %v876
    %v917 = vadd.f32 %v801, %v877
    %v918 = vadd.f32 %v802, %v878
    %v919 = vadd.f32 %v803, %v879
    %v920 = vadd.f32 %v804, %v880
    %v921 = vadd.f32 %v805, %v881
    %v922 = vadd.f32 %v806, %v882
    %v923 = vadd.f32 %v807, %v883
    %v924 = vadd.f32 %v808, %v884
    %v925 = vadd.f32 %v809, %v885
    %vm926 = vcmask 523264
    %v927 = vsel %vm926, %v886, 0.0
    %v928 = vsel %vm926, %v887, 0.0
    %v929 = vadd.f32 %v927, %v928
    %v930 = vrot.slane %v929, 4
    %v931 = vadd.f32 %v929, %v930
    %v932 = vrot.slane %v931, 2
    %v933 = vadd.f32 %v931, %v932
    %v934 = vrot.slane %v933, 1
    %v935 = vadd.f32 %v933, %v934
    %v936 = vsel %vm926, %v888, 0.0
    %v937 = vsel %vm926, %v889, 0.0
    %v938 = vadd.f32 %v936, %v937
    %v939 = vrot.slane %v938, 4
    %v940 = vadd.f32 %v938, %v939
    %v941 = vrot.slane %v940, 2
    %v942 = vadd.f32 %v940, %v941
    %v943 = vrot.slane %v942, 1
    %v944 = vadd.f32 %v942, %v943
    %v945 = vsel %vm926, %v890, 0.0
    %v946 = vsel %vm926, %v891, 0.0
    %v947 = vadd.f32 %v945, %v946
    %v948 = vrot.slane %v947, 4
    %v949 = vadd.f32 %v947, %v948
    %v950 = vrot.slane %v949, 2
    %v951 = vadd.f32 %v949, %v950
    %v952 = vrot.slane %v951, 1
    %v953 = vadd.f32 %v951, %v952
    %v954 = vsel %vm926, %v892, 0.0
    %v955 = vsel %vm926, %v893, 0.0
    %v956 = vadd.f32 %v954, %v955
    %v957 = vrot.slane %v956, 4
    %v958 = vadd.f32 %v956, %v957
    %v959 = vrot.slane %v958, 2
    %v960 = vadd.f32 %v958, %v959
    %v961 = vrot.slane %v960, 1
    %v962 = vadd.f32 %v960, %v961
    %v963 = vsel %vm926, %v894, 0.0
    %v964 = vsel %vm926, %v895, 0.0
    %v965 = vadd.f32 %v963, %v964
    %v966 = vrot.slane %v965, 4
    %v967 = vadd.f32 %v965, %v966
    %v968 = vrot.slane %v967, 2
    %v969 = vadd.f32 %v967, %v968
    %v970 = vrot.slane %v969, 1
    %v971 = vadd.f32 %v969, %v970
    %v972 = vsel %vm926, %v896, 0.0
    %v973 = vsel %vm926, %v897, 0.0
    %v974 = vadd.f32 %v972, %v973
    %v975 = vrot.slane %v974, 4
    %v976 = vadd.f32 %v974, %v975
    %v977 = vrot.slane %v976, 2
    %v978 = vadd.f32 %v976, %v977
    %v979 = vrot.slane %v978, 1
    %v980 = vadd.f32 %v978, %v979
    %v981 = vsel %vm926, %v898, 0.0
    %v982 = vsel %vm926, %v899, 0.0
    %v983 = vadd.f32 %v981, %v982
    %v984 = vrot.slane %v983, 4
    %v985 = vadd.f32 %v983, %v984
    %v986 = vrot.slane %v985, 2
    %v987 = vadd.f32 %v985, %v986
    %v988 = vrot.slane %v987, 1
    %v989 = vadd.f32 %v987, %v988
    %v990 = vsel %vm926, %v900, 0.0
    %v991 = vsel %vm926, %v901, 0.0
    %v992 = vadd.f32 %v990, %v991
    %v993 = vrot.slane %v992, 4
    %v994 = vadd.f32 %v992, %v993
    %v995 = vrot.slane %v994, 2
    %v996 = vadd.f32 %v994, %v995
    %v997 = vrot.slane %v996, 1
    %v998 = vadd.f32 %v996, %v997
    %v999 = vsel %vm926, %v902, 0.0
    %v1000 = vsel %vm926, %v903, 0.0
    %v1001 = vadd.f32 %v999, %v1000
    %v1002 = vrot.slane %v1001, 4
    %v1003 = vadd.f32 %v1001, %v1002
    %v1004 = vrot.slane %v1003, 2
    %v1005 = vadd.f32 %v1003, %v1004
    %v1006 = vrot.slane %v1005, 1
    %v1007 = vadd.f32 %v1005, %v1006
    %v1008 = vsel %vm926, %v904, 0.0
    %v1009 = vsel %vm926, %v905, 0.0
    %v1010 = vadd.f32 %v1008, %v1009
    %v1011 = vrot.slane %v1010, 4
    %v1012 = vadd.f32 %v1010, %v1011
    %v1013 = vrot.slane %v1012, 2
    %v1014 = vadd.f32 %v1012, %v1013
    %v1015 = vrot.slane %v1014, 1
    %v1016 = vadd.f32 %v1014, %v1015
    %v1017 = vsel %vm926, %v906, 0.0
    %v1018 = vsel %vm926, %v907, 0.0
    %v1019 = vadd.f32 %v1017, %v1018
    %v1020 = vrot.slane %v1019, 4
    %v1021 = vadd.f32 %v1019, %v1020
    %v1022 = vrot.slane %v1021, 2
    %v1023 = vadd.f32 %v1021, %v1022
    %v1024 = vrot.slane %v1023, 1
    %v1025 = vadd.f32 %v1023, %v1024
    %v1026 = vsel %vm926, %v908, 0.0
    %v1027 = vsel %vm926, %v909, 0.0
    %v1028 = vadd.f32 %v1026, %v1027
    %v1029 = vrot.slane %v1028, 4
    %v1030 = vadd.f32 %v1028, %v1029
    %v1031 = vrot.slane %v1030, 2
    %v1032 = vadd.f32 %v1030, %v1031
    %v1033 = vrot.slane %v1032, 1
    %v1034 = vadd.f32 %v1032, %v1033
    %v1035 = vsel %vm926, %v910, 0.0
    %v1036 = vsel %vm926, %v911, 0.0
    %v1037 = vadd.f32 %v1035, %v1036
    %v1038 = vrot.slane %v1037, 4
    %v1039 = vadd.f32 %v1037, %v1038
    %v1040 = vrot.slane %v1039, 2
    %v1041 = vadd.f32 %v1039, %v1040
    %v1042 = vrot.slane %v1041, 1
    %v1043 = vadd.f32 %v1041, %v1042
    %v1044 = vsel %vm926, %v912, 0.0
    %v1045 = vsel %vm926, %v913, 0.0
    %v1046 = vadd.f32 %v1044, %v1045
    %v1047 = vrot.slane %v1046, 4
    %v1048 = vadd.f32 %v1046, %v1047
    %v1049 = vrot.slane %v1048, 2
    %v1050 = vadd.f32 %v1048, %v1049
    %v1051 = vrot.slane %v1050, 1
    %v1052 = vadd.f32 %v1050, %v1051
    %v1053 = vsel %vm926, %v914, 0.0
    %v1054 = vsel %vm926, %v915, 0.0
    %v1055 = vadd.f32 %v1053, %v1054
    %v1056 = vrot.slane %v1055, 4
    %v1057 = vadd.f32 %v1055, %v1056
    %v1058 = vrot.slane %v1057, 2
    %v1059 = vadd.f32 %v1057, %v1058
    %v1060 = vrot.slane %v1059, 1
    %v1061 = vadd.f32 %v1059, %v1060
    %v1062 = vsel %vm926, %v916, 0.0
    %v1063 = vsel %vm926, %v917, 0.0
    %v1064 = vadd.f32 %v1062, %v1063
    %v1065 = vrot.slane %v1064, 4
    %v1066 = vadd.f32 %v1064, %v1065
    %v1067 = vrot.slane %v1066, 2
    %v1068 = vadd.f32 %v1066, %v1067
    %v1069 = vrot.slane %v1068, 1
    %v1070 = vadd.f32 %v1068, %v1069
    %v1071 = vsel %vm926, %v918, 0.0
    %v1072 = vsel %vm926, %v919, 0.0
    %v1073 = vadd.f32 %v1071, %v1072
    %v1074 = vrot.slane %v1073, 4
    %v1075 = vadd.f32 %v1073, %v1074
    %v1076 = vrot.slane %v1075, 2
    %v1077 = vadd.f32 %v1075, %v1076
    %v1078 = vrot.slane %v1077, 1
    %v1079 = vadd.f32 %v1077, %v1078
    %v1080 = vsel %vm926, %v920, 0.0
    %v1081 = vsel %vm926, %v921, 0.0
    %v1082 = vadd.f32 %v1080, %v1081
    %v1083 = vrot.slane %v1082, 4
    %v1084 = vadd.f32 %v1082, %v1083
    %v1085 = vrot.slane %v1084, 2
    %v1086 = vadd.f32 %v1084, %v1085
    %v1087 = vrot.slane %v1086, 1
    %v1088 = vadd.f32 %v1086, %v1087
    %v1089 = vsel %vm926, %v922, 0.0
    %v1090 = vsel %vm926, %v923, 0.0
    %v1091 = vadd.f32 %v1089, %v1090
    %v1092 = vrot.slane %v1091, 4
    %v1093 = vadd.f32 %v1091, %v1092
    %v1094 = vrot.slane %v1093, 2
    %v1095 = vadd.f32 %v1093, %v1094
    %v1096 = vrot.slane %v1095, 1
    %v1097 = vadd.f32 %v1095, %v1096
    %v1098 = vsel %vm926, %v924, 0.0
    %v1099 = vsel %vm926, %v925, 0.0
    %v1100 = vadd.f32 %v1098, %v1099
    %v1101 = vrot.slane %v1100, 4
    %v1102 = vadd.f32 %v1100, %v1101
    %v1103 = vrot.slane %v1102, 2
    %v1104 = vadd.f32 %v1102, %v1103
    %v1105 = vrot.slane %v1104, 1
    %v1106 = vadd.f32 %v1104, %v1105
    %v1107 = vsel %vm926, 1.0, 0.0
    %1108 = vadd.xlane.f32.xlu0 %v1107
    %v1109 = vpop.xlane.xlu0 %1108
    %v1110 = vrcp.pop %v1109
    %v1111 = vmul.f32 1.0, %v1110
    %v1112 = vmul.f32 %v1111, %v935
    %v1113 = vmul.f32 %v1111, %v944
    %v1114 = vmul.f32 %v1111, %v953
    %v1115 = vmul.f32 %v1111, %v962
    %v1116 = vmul.f32 %v1111, %v971
    %v1117 = vmul.f32 %v1111, %v980
    %v1118 = vmul.f32 %v1111, %v989
    %v1119 = vmul.f32 %v1111, %v998
    %v1120 = vmul.f32 %v1111, %v1007
    %v1121 = vmul.f32 %v1111, %v1016
    %v1122 = vmul.f32 %v1111, %v1025
    %v1123 = vmul.f32 %v1111, %v1034
    %v1124 = vmul.f32 %v1111, %v1043
    %v1125 = vmul.f32 %v1111, %v1052
    %v1126 = vmul.f32 %v1111, %v1061
    %v1127 = vmul.f32 %v1111, %v1070
    %v1128 = vmul.f32 %v1111, %v1079
    %v1129 = vmul.f32 %v1111, %v1088
    %v1130 = vmul.f32 %v1111, %v1097
    %v1131 = vmul.f32 %v1111, %v1106
    %v1132 = vadd.f32 %v1112, 0.0
    %v1133 = vadd.f32 %v1113, 0.0
    %v1134 = vadd.f32 %v1114, 0.0
    %v1135 = vadd.f32 %v1115, 0.0
    %v1136 = vadd.f32 %v1116, 0.0
    %v1137 = vadd.f32 %v1117, 0.0
    %v1138 = vadd.f32 %v1118, 0.0
    %v1139 = vadd.f32 %v1119, 0.0
    %v1140 = vadd.f32 %v1120, 0.0
    %v1141 = vadd.f32 %v1121, 0.0
    %v1142 = vadd.f32 %v1122, 0.0
    %v1143 = vadd.f32 %v1123, 0.0
    %v1144 = vadd.f32 %v1124, 0.0
    %v1145 = vadd.f32 %v1125, 0.0
    %v1146 = vadd.f32 %v1126, 0.0
    %v1147 = vadd.f32 %v1127, 0.0
    %v1148 = vadd.f32 %v1128, 0.0
    %v1149 = vadd.f32 %v1129, 0.0
    %v1150 = vadd.f32 %v1130, 0.0
    %v1151 = vadd.f32 %v1131, 0.0
    %v1152 = vsel %vm926, %v1132, -inf
    %1153 = vmax.xlane.f32.xlu0 %v1152
    %v1154 = vpop.xlane.xlu0 %1153
    %v1155 = vsel %vm926, %v1133, -inf
    %1156 = vmax.xlane.f32.xlu0 %v1155
    %v1157 = vpop.xlane.xlu0 %1156
    %v1158 = vsel %vm926, %v1134, -inf
    %1159 = vmax.xlane.f32.xlu0 %v1158
    %v1160 = vpop.xlane.xlu0 %1159
    %v1161 = vsel %vm926, %v1135, -inf
    %1162 = vmax.xlane.f32.xlu0 %v1161
    %v1163 = vpop.xlane.xlu0 %1162
    %v1164 = vsel %vm926, %v1136, -inf
    %1165 = vmax.xlane.f32.xlu0 %v1164
    %v1166 = vpop.xlane.xlu0 %1165
    %v1167 = vsel %vm926, %v1137, -inf
    %1168 = vmax.xlane.f32.xlu0 %v1167
    %v1169 = vpop.xlane.xlu0 %1168
    %v1170 = vsel %vm926, %v1138, -inf
    %1171 = vmax.xlane.f32.xlu0 %v1170
    %v1172 = vpop.xlane.xlu0 %1171
    %v1173 = vsel %vm926, %v1139, -inf
    %1174 = vmax.xlane.f32.xlu0 %v1173
    %v1175 = vpop.xlane.xlu0 %1174
    %v1176 = vsel %vm926, %v1140, -inf
    %1177 = vmax.xlane.f32.xlu0 %v1176
    %v1178 = vpop.xlane.xlu0 %1177
    %v1179 = vsel %vm926, %v1141, -inf
    %1180 = vmax.xlane.f32.xlu0 %v1179
    %v1181 = vpop.xlane.xlu0 %1180
    %v1182 = vsel %vm926, %v1142, -inf
    %1183 = vmax.xlane.f32.xlu0 %v1182
    %v1184 = vpop.xlane.xlu0 %1183
    %v1185 = vsel %vm926, %v1143, -inf
    %1186 = vmax.xlane.f32.xlu0 %v1185
    %v1187 = vpop.xlane.xlu0 %1186
    %v1188 = vsel %vm926, %v1144, -inf
    %1189 = vmax.xlane.f32.xlu0 %v1188
    %v1190 = vpop.xlane.xlu0 %1189
    %v1191 = vsel %vm926, %v1145, -inf
    %1192 = vmax.xlane.f32.xlu0 %v1191
    %v1193 = vpop.xlane.xlu0 %1192
    %v1194 = vsel %vm926, %v1146, -inf
    %1195 = vmax.xlane.f32.xlu0 %v1194
    %v1196 = vpop.xlane.xlu0 %1195
    %v1197 = vsel %vm926, %v1147, -inf
    %1198 = vmax.xlane.f32.xlu0 %v1197
    %v1199 = vpop.xlane.xlu0 %1198
    %v1200 = vsel %vm926, %v1148, -inf
    %1201 = vmax.xlane.f32.xlu0 %v1200
    %v1202 = vpop.xlane.xlu0 %1201
    %v1203 = vsel %vm926, %v1149, -inf
    %1204 = vmax.xlane.f32.xlu0 %v1203
    %v1205 = vpop.xlane.xlu0 %1204
    %v1206 = vsel %vm926, %v1150, -inf
    %1207 = vmax.xlane.f32.xlu0 %v1206
    %v1208 = vpop.xlane.xlu0 %1207
    %v1209 = vsel %vm926, %v1151, -inf
    %1210 = vmax.xlane.f32.xlu0 %v1209
    %v1211 = vpop.xlane.xlu0 %1210
    %v1212 = vsub.f32 %v1132, %v1154
    %v1213 = vsub.f32 %v1133, %v1157
    %v1214 = vsub.f32 %v1134, %v1160
    %v1215 = vsub.f32 %v1135, %v1163
    %v1216 = vsub.f32 %v1136, %v1166
    %v1217 = vsub.f32 %v1137, %v1169
    %v1218 = vsub.f32 %v1138, %v1172
    %v1219 = vsub.f32 %v1139, %v1175
    %v1220 = vsub.f32 %v1140, %v1178
    %v1221 = vsub.f32 %v1141, %v1181
    %v1222 = vsub.f32 %v1142, %v1184
    %v1223 = vsub.f32 %v1143, %v1187
    %v1224 = vsub.f32 %v1144, %v1190
    %v1225 = vsub.f32 %v1145, %v1193
    %v1226 = vsub.f32 %v1146, %v1196
    %v1227 = vsub.f32 %v1147, %v1199
    %v1228 = vsub.f32 %v1148, %v1202
    %v1229 = vsub.f32 %v1149, %v1205
    %v1230 = vsub.f32 %v1150, %v1208
    %v1231 = vsub.f32 %v1151, %v1211
    %v1232 = vmul.f32 %v1212, 1.442695
    %v1233 = vpow.pop %v1232
    %v1234 = vmul.f32 %v1213, 1.442695
    %v1235 = vpow.pop %v1234
    %v1236 = vmul.f32 %v1214, 1.442695
    %v1237 = vpow.pop %v1236
    %v1238 = vmul.f32 %v1215, 1.442695
    %v1239 = vpow.pop %v1238
    %v1240 = vmul.f32 %v1216, 1.442695
    %v1241 = vpow.pop %v1240
    %v1242 = vmul.f32 %v1217, 1.442695
    %v1243 = vpow.pop %v1242
    %v1244 = vmul.f32 %v1218, 1.442695
    %v1245 = vpow.pop %v1244
    %v1246 = vmul.f32 %v1219, 1.442695
    %v1247 = vpow.pop %v1246
    %v1248 = vmul.f32 %v1220, 1.442695
    %v1249 = vpow.pop %v1248
    %v1250 = vmul.f32 %v1221, 1.442695
    %v1251 = vpow.pop %v1250
    %v1252 = vmul.f32 %v1222, 1.442695
    %v1253 = vpow.pop %v1252
    %v1254 = vmul.f32 %v1223, 1.442695
    %v1255 = vpow.pop %v1254
    %v1256 = vmul.f32 %v1224, 1.442695
    %v1257 = vpow.pop %v1256
    %v1258 = vmul.f32 %v1225, 1.442695
    %v1259 = vpow.pop %v1258
    %v1260 = vmul.f32 %v1226, 1.442695
    %v1261 = vpow.pop %v1260
    %v1262 = vmul.f32 %v1227, 1.442695
    %v1263 = vpow.pop %v1262
    %v1264 = vmul.f32 %v1228, 1.442695
    %v1265 = vpow.pop %v1264
    %v1266 = vmul.f32 %v1229, 1.442695
    %v1267 = vpow.pop %v1266
    %v1268 = vmul.f32 %v1230, 1.442695
    %v1269 = vpow.pop %v1268
    %v1270 = vmul.f32 %v1231, 1.442695
    %v1271 = vpow.pop %v1270
    %v1272 = vsel %vm926, %v1233, 0.0
    %1273 = vadd.xlane.f32.xlu0 %v1272
    %v1274 = vpop.xlane.xlu0 %1273
    %v1275 = vsel %vm926, %v1235, 0.0
    %1276 = vadd.xlane.f32.xlu0 %v1275
    %v1277 = vpop.xlane.xlu0 %1276
    %v1278 = vsel %vm926, %v1237, 0.0
    %1279 = vadd.xlane.f32.xlu0 %v1278
    %v1280 = vpop.xlane.xlu0 %1279
    %v1281 = vsel %vm926, %v1239, 0.0
    %1282 = vadd.xlane.f32.xlu0 %v1281
    %v1283 = vpop.xlane.xlu0 %1282
    %v1284 = vsel %vm926, %v1241, 0.0
    %1285 = vadd.xlane.f32.xlu0 %v1284
    %v1286 = vpop.xlane.xlu0 %1285
    %v1287 = vsel %vm926, %v1243, 0.0
    %1288 = vadd.xlane.f32.xlu0 %v1287
    %v1289 = vpop.xlane.xlu0 %1288
    %v1290 = vsel %vm926, %v1245, 0.0
    %1291 = vadd.xlane.f32.xlu0 %v1290
    %v1292 = vpop.xlane.xlu0 %1291
    %v1293 = vsel %vm926, %v1247, 0.0
    %1294 = vadd.xlane.f32.xlu0 %v1293
    %v1295 = vpop.xlane.xlu0 %1294
    %v1296 = vsel %vm926, %v1249, 0.0
    %1297 = vadd.xlane.f32.xlu0 %v1296
    %v1298 = vpop.xlane.xlu0 %1297
    %v1299 = vsel %vm926, %v1251, 0.0
    %1300 = vadd.xlane.f32.xlu0 %v1299
    %v1301 = vpop.xlane.xlu0 %1300
    %v1302 = vsel %vm926, %v1253, 0.0
    %1303 = vadd.xlane.f32.xlu0 %v1302
    %v1304 = vpop.xlane.xlu0 %1303
    %v1305 = vsel %vm926, %v1255, 0.0
    %1306 = vadd.xlane.f32.xlu0 %v1305
    %v1307 = vpop.xlane.xlu0 %1306
    %v1308 = vsel %vm926, %v1257, 0.0
    %1309 = vadd.xlane.f32.xlu0 %v1308
    %v1310 = vpop.xlane.xlu0 %1309
    %v1311 = vsel %vm926, %v1259, 0.0
    %1312 = vadd.xlane.f32.xlu0 %v1311
    %v1313 = vpop.xlane.xlu0 %1312
    %v1314 = vsel %vm926, %v1261, 0.0
    %1315 = vadd.xlane.f32.xlu0 %v1314
    %v1316 = vpop.xlane.xlu0 %1315
    %v1317 = vsel %vm926, %v1263, 0.0
    %1318 = vadd.xlane.f32.xlu0 %v1317
    %v1319 = vpop.xlane.xlu0 %1318
    %v1320 = vsel %vm926, %v1265, 0.0
    %1321 = vadd.xlane.f32.xlu0 %v1320
    %v1322 = vpop.xlane.xlu0 %1321
    %v1323 = vsel %vm926, %v1267, 0.0
    %1324 = vadd.xlane.f32.xlu0 %v1323
    %v1325 = vpop.xlane.xlu0 %1324
    %v1326 = vsel %vm926, %v1269, 0.0
    %1327 = vadd.xlane.f32.xlu0 %v1326
    %v1328 = vpop.xlane.xlu0 %1327
    %v1329 = vsel %vm926, %v1271, 0.0
    %1330 = vadd.xlane.f32.xlu0 %v1329
    %v1331 = vpop.xlane.xlu0 %1330
    %v1332 = vrcp.pop %v1274
    %v1333 = vmul.f32 %v1233, %v1332
    %v1334 = vrcp.pop %v1277
    %v1335 = vmul.f32 %v1235, %v1334
    %v1336 = vrcp.pop %v1280
    %v1337 = vmul.f32 %v1237, %v1336
    %v1338 = vrcp.pop %v1283
    %v1339 = vmul.f32 %v1239, %v1338
    %v1340 = vrcp.pop %v1286
    %v1341 = vmul.f32 %v1241, %v1340
    %v1342 = vrcp.pop %v1289
    %v1343 = vmul.f32 %v1243, %v1342
    %v1344 = vrcp.pop %v1292
    %v1345 = vmul.f32 %v1245, %v1344
    %v1346 = vrcp.pop %v1295
    %v1347 = vmul.f32 %v1247, %v1346
    %v1348 = vrcp.pop %v1298
    %v1349 = vmul.f32 %v1249, %v1348
    %v1350 = vrcp.pop %v1301
    %v1351 = vmul.f32 %v1251, %v1350
    %v1352 = vrcp.pop %v1304
    %v1353 = vmul.f32 %v1253, %v1352
    %v1354 = vrcp.pop %v1307
    %v1355 = vmul.f32 %v1255, %v1354
    %v1356 = vrcp.pop %v1310
    %v1357 = vmul.f32 %v1257, %v1356
    %v1358 = vrcp.pop %v1313
    %v1359 = vmul.f32 %v1259, %v1358
    %v1360 = vrcp.pop %v1316
    %v1361 = vmul.f32 %v1261, %v1360
    %v1362 = vrcp.pop %v1319
    %v1363 = vmul.f32 %v1263, %v1362
    %v1364 = vrcp.pop %v1322
    %v1365 = vmul.f32 %v1265, %v1364
    %v1366 = vrcp.pop %v1325
    %v1367 = vmul.f32 %v1267, %v1366
    %v1368 = vrcp.pop %v1328
    %v1369 = vmul.f32 %v1269, %v1368
    %v1370 = vrcp.pop %v1331
    %v1371 = vmul.f32 %v1271, %v1370
    %v1372 = vmul.f32 %v1333, %v935
    %v1373 = vmul.f32 %v1335, %v944
    %v1374 = vmul.f32 %v1337, %v953
    %v1375 = vmul.f32 %v1339, %v962
    %v1376 = vmul.f32 %v1341, %v971
    %v1377 = vmul.f32 %v1343, %v980
    %v1378 = vmul.f32 %v1345, %v989
    %v1379 = vmul.f32 %v1347, %v998
    %v1380 = vmul.f32 %v1349, %v1007
    %v1381 = vmul.f32 %v1351, %v1016
    %v1382 = vmul.f32 %v1353, %v1025
    %v1383 = vmul.f32 %v1355, %v1034
    %v1384 = vmul.f32 %v1357, %v1043
    %v1385 = vmul.f32 %v1359, %v1052
    %v1386 = vmul.f32 %v1361, %v1061
    %v1387 = vmul.f32 %v1363, %v1070
    %v1388 = vmul.f32 %v1365, %v1079
    %v1389 = vmul.f32 %v1367, %v1088
    %v1390 = vmul.f32 %v1369, %v1097
    %v1391 = vmul.f32 %v1371, %v1106
    %v1392 = vadd.f32 %v1132, %v1372
    %v1393 = vadd.f32 %v1133, %v1373
    %v1394 = vadd.f32 %v1134, %v1374
    %v1395 = vadd.f32 %v1135, %v1375
    %v1396 = vadd.f32 %v1136, %v1376
    %v1397 = vadd.f32 %v1137, %v1377
    %v1398 = vadd.f32 %v1138, %v1378
    %v1399 = vadd.f32 %v1139, %v1379
    %v1400 = vadd.f32 %v1140, %v1380
    %v1401 = vadd.f32 %v1141, %v1381
    %v1402 = vadd.f32 %v1142, %v1382
    %v1403 = vadd.f32 %v1143, %v1383
    %v1404 = vadd.f32 %v1144, %v1384
    %v1405 = vadd.f32 %v1145, %v1385
    %v1406 = vadd.f32 %v1146, %v1386
    %v1407 = vadd.f32 %v1147, %v1387
    %v1408 = vadd.f32 %v1148, %v1388
    %v1409 = vadd.f32 %v1149, %v1389
    %v1410 = vadd.f32 %v1150, %v1390
    %v1411 = vadd.f32 %v1151, %v1391
    %v1412 = vsel %vm926, %v1392, -inf
    %1413 = vmax.xlane.f32.xlu0 %v1412
    %v1414 = vpop.xlane.xlu0 %1413
    %v1415 = vsel %vm926, %v1393, -inf
    %1416 = vmax.xlane.f32.xlu0 %v1415
    %v1417 = vpop.xlane.xlu0 %1416
    %v1418 = vsel %vm926, %v1394, -inf
    %1419 = vmax.xlane.f32.xlu0 %v1418
    %v1420 = vpop.xlane.xlu0 %1419
    %v1421 = vsel %vm926, %v1395, -inf
    %1422 = vmax.xlane.f32.xlu0 %v1421
    %v1423 = vpop.xlane.xlu0 %1422
    %v1424 = vsel %vm926, %v1396, -inf
    %1425 = vmax.xlane.f32.xlu0 %v1424
    %v1426 = vpop.xlane.xlu0 %1425
    %v1427 = vsel %vm926, %v1397, -inf
    %1428 = vmax.xlane.f32.xlu0 %v1427
    %v1429 = vpop.xlane.xlu0 %1428
    %v1430 = vsel %vm926, %v1398, -inf
    %1431 = vmax.xlane.f32.xlu0 %v1430
    %v1432 = vpop.xlane.xlu0 %1431
    %v1433 = vsel %vm926, %v1399, -inf
    %1434 = vmax.xlane.f32.xlu0 %v1433
    %v1435 = vpop.xlane.xlu0 %1434
    %v1436 = vsel %vm926, %v1400, -inf
    %1437 = vmax.xlane.f32.xlu0 %v1436
    %v1438 = vpop.xlane.xlu0 %1437
    %v1439 = vsel %vm926, %v1401, -inf
    %1440 = vmax.xlane.f32.xlu0 %v1439
    %v1441 = vpop.xlane.xlu0 %1440
    %v1442 = vsel %vm926, %v1402, -inf
    %1443 = vmax.xlane.f32.xlu0 %v1442
    %v1444 = vpop.xlane.xlu0 %1443
    %v1445 = vsel %vm926, %v1403, -inf
    %1446 = vmax.xlane.f32.xlu0 %v1445
    %v1447 = vpop.xlane.xlu0 %1446
    %v1448 = vsel %vm926, %v1404, -inf
    %1449 = vmax.xlane.f32.xlu0 %v1448
    %v1450 = vpop.xlane.xlu0 %1449
    %v1451 = vsel %vm926, %v1405, -inf
    %1452 = vmax.xlane.f32.xlu0 %v1451
    %v1453 = vpop.xlane.xlu0 %1452
    %v1454 = vsel %vm926, %v1406, -inf
    %1455 = vmax.xlane.f32.xlu0 %v1454
    %v1456 = vpop.xlane.xlu0 %1455
    %v1457 = vsel %vm926, %v1407, -inf
    %1458 = vmax.xlane.f32.xlu0 %v1457
    %v1459 = vpop.xlane.xlu0 %1458
    %v1460 = vsel %vm926, %v1408, -inf
    %1461 = vmax.xlane.f32.xlu0 %v1460
    %v1462 = vpop.xlane.xlu0 %1461
    %v1463 = vsel %vm926, %v1409, -inf
    %1464 = vmax.xlane.f32.xlu0 %v1463
    %v1465 = vpop.xlane.xlu0 %1464
    %v1466 = vsel %vm926, %v1410, -inf
    %1467 = vmax.xlane.f32.xlu0 %v1466
    %v1468 = vpop.xlane.xlu0 %1467
    %v1469 = vsel %vm926, %v1411, -inf
    %1470 = vmax.xlane.f32.xlu0 %v1469
    %v1471 = vpop.xlane.xlu0 %1470
    %v1472 = vsub.f32 %v1392, %v1414
    %v1473 = vsub.f32 %v1393, %v1417
    %v1474 = vsub.f32 %v1394, %v1420
    %v1475 = vsub.f32 %v1395, %v1423
    %v1476 = vsub.f32 %v1396, %v1426
    %v1477 = vsub.f32 %v1397, %v1429
    %v1478 = vsub.f32 %v1398, %v1432
    %v1479 = vsub.f32 %v1399, %v1435
    %v1480 = vsub.f32 %v1400, %v1438
    %v1481 = vsub.f32 %v1401, %v1441
    %v1482 = vsub.f32 %v1402, %v1444
    %v1483 = vsub.f32 %v1403, %v1447
    %v1484 = vsub.f32 %v1404, %v1450
    %v1485 = vsub.f32 %v1405, %v1453
    %v1486 = vsub.f32 %v1406, %v1456
    %v1487 = vsub.f32 %v1407, %v1459
    %v1488 = vsub.f32 %v1408, %v1462
    %v1489 = vsub.f32 %v1409, %v1465
    %v1490 = vsub.f32 %v1410, %v1468
    %v1491 = vsub.f32 %v1411, %v1471
    %v1492 = vmul.f32 %v1472, 1.442695
    %v1493 = vpow.pop %v1492
    %v1494 = vmul.f32 %v1473, 1.442695
    %v1495 = vpow.pop %v1494
    %v1496 = vmul.f32 %v1474, 1.442695
    %v1497 = vpow.pop %v1496
    %v1498 = vmul.f32 %v1475, 1.442695
    %v1499 = vpow.pop %v1498
    %v1500 = vmul.f32 %v1476, 1.442695
    %v1501 = vpow.pop %v1500
    %v1502 = vmul.f32 %v1477, 1.442695
    %v1503 = vpow.pop %v1502
    %v1504 = vmul.f32 %v1478, 1.442695
    %v1505 = vpow.pop %v1504
    %v1506 = vmul.f32 %v1479, 1.442695
    %v1507 = vpow.pop %v1506
    %v1508 = vmul.f32 %v1480, 1.442695
    %v1509 = vpow.pop %v1508
    %v1510 = vmul.f32 %v1481, 1.442695
    %v1511 = vpow.pop %v1510
    %v1512 = vmul.f32 %v1482, 1.442695
    %v1513 = vpow.pop %v1512
    %v1514 = vmul.f32 %v1483, 1.442695
    %v1515 = vpow.pop %v1514
    %v1516 = vmul.f32 %v1484, 1.442695
    %v1517 = vpow.pop %v1516
    %v1518 = vmul.f32 %v1485, 1.442695
    %v1519 = vpow.pop %v1518
    %v1520 = vmul.f32 %v1486, 1.442695
    %v1521 = vpow.pop %v1520
    %v1522 = vmul.f32 %v1487, 1.442695
    %v1523 = vpow.pop %v1522
    %v1524 = vmul.f32 %v1488, 1.442695
    %v1525 = vpow.pop %v1524
    %v1526 = vmul.f32 %v1489, 1.442695
    %v1527 = vpow.pop %v1526
    %v1528 = vmul.f32 %v1490, 1.442695
    %v1529 = vpow.pop %v1528
    %v1530 = vmul.f32 %v1491, 1.442695
    %v1531 = vpow.pop %v1530
    %v1532 = vsel %vm926, %v1493, 0.0
    %1533 = vadd.xlane.f32.xlu0 %v1532
    %v1534 = vpop.xlane.xlu0 %1533
    %v1535 = vsel %vm926, %v1495, 0.0
    %1536 = vadd.xlane.f32.xlu0 %v1535
    %v1537 = vpop.xlane.xlu0 %1536
    %v1538 = vsel %vm926, %v1497, 0.0
    %1539 = vadd.xlane.f32.xlu0 %v1538
    %v1540 = vpop.xlane.xlu0 %1539
    %v1541 = vsel %vm926, %v1499, 0.0
    %1542 = vadd.xlane.f32.xlu0 %v1541
    %v1543 = vpop.xlane.xlu0 %1542
    %v1544 = vsel %vm926, %v1501, 0.0
    %1545 = vadd.xlane.f32.xlu0 %v1544
    %v1546 = vpop.xlane.xlu0 %1545
    %v1547 = vsel %vm926, %v1503, 0.0
    %1548 = vadd.xlane.f32.xlu0 %v1547
    %v1549 = vpop.xlane.xlu0 %1548
    %v1550 = vsel %vm926, %v1505, 0.0
    %1551 = vadd.xlane.f32.xlu0 %v1550
    %v1552 = vpop.xlane.xlu0 %1551
    %v1553 = vsel %vm926, %v1507, 0.0
    %1554 = vadd.xlane.f32.xlu0 %v1553
    %v1555 = vpop.xlane.xlu0 %1554
    %v1556 = vsel %vm926, %v1509, 0.0
    %1557 = vadd.xlane.f32.xlu0 %v1556
    %v1558 = vpop.xlane.xlu0 %1557
    %v1559 = vsel %vm926, %v1511, 0.0
    %1560 = vadd.xlane.f32.xlu0 %v1559
    %v1561 = vpop.xlane.xlu0 %1560
    %v1562 = vsel %vm926, %v1513, 0.0
    %1563 = vadd.xlane.f32.xlu0 %v1562
    %v1564 = vpop.xlane.xlu0 %1563
    %v1565 = vsel %vm926, %v1515, 0.0
    %1566 = vadd.xlane.f32.xlu0 %v1565
    %v1567 = vpop.xlane.xlu0 %1566
    %v1568 = vsel %vm926, %v1517, 0.0
    %1569 = vadd.xlane.f32.xlu0 %v1568
    %v1570 = vpop.xlane.xlu0 %1569
    %v1571 = vsel %vm926, %v1519, 0.0
    %1572 = vadd.xlane.f32.xlu0 %v1571
    %v1573 = vpop.xlane.xlu0 %1572
    %v1574 = vsel %vm926, %v1521, 0.0
    %1575 = vadd.xlane.f32.xlu0 %v1574
    %v1576 = vpop.xlane.xlu0 %1575
    %v1577 = vsel %vm926, %v1523, 0.0
    %1578 = vadd.xlane.f32.xlu0 %v1577
    %v1579 = vpop.xlane.xlu0 %1578
    %v1580 = vsel %vm926, %v1525, 0.0
    %1581 = vadd.xlane.f32.xlu0 %v1580
    %v1582 = vpop.xlane.xlu0 %1581
    %v1583 = vsel %vm926, %v1527, 0.0
    %1584 = vadd.xlane.f32.xlu0 %v1583
    %v1585 = vpop.xlane.xlu0 %1584
    %v1586 = vsel %vm926, %v1529, 0.0
    %1587 = vadd.xlane.f32.xlu0 %v1586
    %v1588 = vpop.xlane.xlu0 %1587
    %v1589 = vsel %vm926, %v1531, 0.0
    %1590 = vadd.xlane.f32.xlu0 %v1589
    %v1591 = vpop.xlane.xlu0 %1590
    %v1592 = vrcp.pop %v1534
    %v1593 = vmul.f32 %v1493, %v1592
    %v1594 = vrcp.pop %v1537
    %v1595 = vmul.f32 %v1495, %v1594
    %v1596 = vrcp.pop %v1540
    %v1597 = vmul.f32 %v1497, %v1596
    %v1598 = vrcp.pop %v1543
    %v1599 = vmul.f32 %v1499, %v1598
    %v1600 = vrcp.pop %v1546
    %v1601 = vmul.f32 %v1501, %v1600
    %v1602 = vrcp.pop %v1549
    %v1603 = vmul.f32 %v1503, %v1602
    %v1604 = vrcp.pop %v1552
    %v1605 = vmul.f32 %v1505, %v1604
    %v1606 = vrcp.pop %v1555
    %v1607 = vmul.f32 %v1507, %v1606
    %v1608 = vrcp.pop %v1558
    %v1609 = vmul.f32 %v1509, %v1608
    %v1610 = vrcp.pop %v1561
    %v1611 = vmul.f32 %v1511, %v1610
    %v1612 = vrcp.pop %v1564
    %v1613 = vmul.f32 %v1513, %v1612
    %v1614 = vrcp.pop %v1567
    %v1615 = vmul.f32 %v1515, %v1614
    %v1616 = vrcp.pop %v1570
    %v1617 = vmul.f32 %v1517, %v1616
    %v1618 = vrcp.pop %v1573
    %v1619 = vmul.f32 %v1519, %v1618
    %v1620 = vrcp.pop %v1576
    %v1621 = vmul.f32 %v1521, %v1620
    %v1622 = vrcp.pop %v1579
    %v1623 = vmul.f32 %v1523, %v1622
    %v1624 = vrcp.pop %v1582
    %v1625 = vmul.f32 %v1525, %v1624
    %v1626 = vrcp.pop %v1585
    %v1627 = vmul.f32 %v1527, %v1626
    %v1628 = vrcp.pop %v1588
    %v1629 = vmul.f32 %v1529, %v1628
    %v1630 = vrcp.pop %v1591
    %v1631 = vmul.f32 %v1531, %v1630
    %v1632 = vmul.f32 %v886, %v1593
    %v1633 = vmul.f32 %v887, %v1593
    %v1634 = vmul.f32 %v888, %v1595
    %v1635 = vmul.f32 %v889, %v1595
    %v1636 = vmul.f32 %v890, %v1597
    %v1637 = vmul.f32 %v891, %v1597
    %v1638 = vmul.f32 %v892, %v1599
    %v1639 = vmul.f32 %v893, %v1599
    %v1640 = vmul.f32 %v894, %v1601
    %v1641 = vmul.f32 %v895, %v1601
    %v1642 = vmul.f32 %v896, %v1603
    %v1643 = vmul.f32 %v897, %v1603
    %v1644 = vmul.f32 %v898, %v1605
    %v1645 = vmul.f32 %v899, %v1605
    %v1646 = vmul.f32 %v900, %v1607
    %v1647 = vmul.f32 %v901, %v1607
    %v1648 = vmul.f32 %v902, %v1609
    %v1649 = vmul.f32 %v903, %v1609
    %v1650 = vmul.f32 %v904, %v1611
    %v1651 = vmul.f32 %v905, %v1611
    %v1652 = vmul.f32 %v906, %v1613
    %v1653 = vmul.f32 %v907, %v1613
    %v1654 = vmul.f32 %v908, %v1615
    %v1655 = vmul.f32 %v909, %v1615
    %v1656 = vmul.f32 %v910, %v1617
    %v1657 = vmul.f32 %v911, %v1617
    %v1658 = vmul.f32 %v912, %v1619
    %v1659 = vmul.f32 %v913, %v1619
    %v1660 = vmul.f32 %v914, %v1621
    %v1661 = vmul.f32 %v915, %v1621
    %v1662 = vmul.f32 %v916, %v1623
    %v1663 = vmul.f32 %v917, %v1623
    %v1664 = vmul.f32 %v918, %v1625
    %v1665 = vmul.f32 %v919, %v1625
    %v1666 = vmul.f32 %v920, %v1627
    %v1667 = vmul.f32 %v921, %v1627
    %v1668 = vmul.f32 %v922, %v1629
    %v1669 = vmul.f32 %v923, %v1629
    %v1670 = vmul.f32 %v924, %v1631
    %v1671 = vmul.f32 %v925, %v1631
    %v1672 = vsel %vm926, %v1632, 0.0
    %1673 = vadd.xlane.f32.xlu0 %v1672
    %v1674 = vpop.xlane.xlu0 %1673
    %v1675 = vsel %vm926, %v1633, 0.0
    %1676 = vadd.xlane.f32.xlu0 %v1675
    %v1677 = vpop.xlane.xlu0 %1676
    %v1678 = vsel %vm926, %v1634, 0.0
    %1679 = vadd.xlane.f32.xlu0 %v1678
    %v1680 = vpop.xlane.xlu0 %1679
    %v1681 = vsel %vm926, %v1635, 0.0
    %1682 = vadd.xlane.f32.xlu0 %v1681
    %v1683 = vpop.xlane.xlu0 %1682
    %v1684 = vsel %vm926, %v1636, 0.0
    %1685 = vadd.xlane.f32.xlu0 %v1684
    %v1686 = vpop.xlane.xlu0 %1685
    %v1687 = vsel %vm926, %v1637, 0.0
    %1688 = vadd.xlane.f32.xlu0 %v1687
    %v1689 = vpop.xlane.xlu0 %1688
    %v1690 = vsel %vm926, %v1638, 0.0
    %1691 = vadd.xlane.f32.xlu0 %v1690
    %v1692 = vpop.xlane.xlu0 %1691
    %v1693 = vsel %vm926, %v1639, 0.0
    %1694 = vadd.xlane.f32.xlu0 %v1693
    %v1695 = vpop.xlane.xlu0 %1694
    %v1696 = vsel %vm926, %v1640, 0.0
    %1697 = vadd.xlane.f32.xlu0 %v1696
    %v1698 = vpop.xlane.xlu0 %1697
    %v1699 = vsel %vm926, %v1641, 0.0
    %1700 = vadd.xlane.f32.xlu0 %v1699
    %v1701 = vpop.xlane.xlu0 %1700
    %v1702 = vsel %vm926, %v1642, 0.0
    %1703 = vadd.xlane.f32.xlu0 %v1702
    %v1704 = vpop.xlane.xlu0 %1703
    %v1705 = vsel %vm926, %v1643, 0.0
    %1706 = vadd.xlane.f32.xlu0 %v1705
    %v1707 = vpop.xlane.xlu0 %1706
    %v1708 = vsel %vm926, %v1644, 0.0
    %1709 = vadd.xlane.f32.xlu0 %v1708
    %v1710 = vpop.xlane.xlu0 %1709
    %v1711 = vsel %vm926, %v1645, 0.0
    %1712 = vadd.xlane.f32.xlu0 %v1711
    %v1713 = vpop.xlane.xlu0 %1712
    %v1714 = vsel %vm926, %v1646, 0.0
    %1715 = vadd.xlane.f32.xlu0 %v1714
    %v1716 = vpop.xlane.xlu0 %1715
    %v1717 = vsel %vm926, %v1647, 0.0
    %1718 = vadd.xlane.f32.xlu0 %v1717
    %v1719 = vpop.xlane.xlu0 %1718
    %v1720 = vsel %vm926, %v1648, 0.0
    %1721 = vadd.xlane.f32.xlu0 %v1720
    %v1722 = vpop.xlane.xlu0 %1721
    %v1723 = vsel %vm926, %v1649, 0.0
    %1724 = vadd.xlane.f32.xlu0 %v1723
    %v1725 = vpop.xlane.xlu0 %1724
    %v1726 = vsel %vm926, %v1650, 0.0
    %1727 = vadd.xlane.f32.xlu0 %v1726
    %v1728 = vpop.xlane.xlu0 %1727
    %v1729 = vsel %vm926, %v1651, 0.0
    %1730 = vadd.xlane.f32.xlu0 %v1729
    %v1731 = vpop.xlane.xlu0 %1730
    %v1732 = vsel %vm926, %v1652, 0.0
    %1733 = vadd.xlane.f32.xlu0 %v1732
    %v1734 = vpop.xlane.xlu0 %1733
    %v1735 = vsel %vm926, %v1653, 0.0
    %1736 = vadd.xlane.f32.xlu0 %v1735
    %v1737 = vpop.xlane.xlu0 %1736
    %v1738 = vsel %vm926, %v1654, 0.0
    %1739 = vadd.xlane.f32.xlu0 %v1738
    %v1740 = vpop.xlane.xlu0 %1739
    %v1741 = vsel %vm926, %v1655, 0.0
    %1742 = vadd.xlane.f32.xlu0 %v1741
    %v1743 = vpop.xlane.xlu0 %1742
    %v1744 = vsel %vm926, %v1656, 0.0
    %1745 = vadd.xlane.f32.xlu0 %v1744
    %v1746 = vpop.xlane.xlu0 %1745
    %v1747 = vsel %vm926, %v1657, 0.0
    %1748 = vadd.xlane.f32.xlu0 %v1747
    %v1749 = vpop.xlane.xlu0 %1748
    %v1750 = vsel %vm926, %v1658, 0.0
    %1751 = vadd.xlane.f32.xlu0 %v1750
    %v1752 = vpop.xlane.xlu0 %1751
    %v1753 = vsel %vm926, %v1659, 0.0
    %1754 = vadd.xlane.f32.xlu0 %v1753
    %v1755 = vpop.xlane.xlu0 %1754
    %v1756 = vsel %vm926, %v1660, 0.0
    %1757 = vadd.xlane.f32.xlu0 %v1756
    %v1758 = vpop.xlane.xlu0 %1757
    %v1759 = vsel %vm926, %v1661, 0.0
    %1760 = vadd.xlane.f32.xlu0 %v1759
    %v1761 = vpop.xlane.xlu0 %1760
    %v1762 = vsel %vm926, %v1662, 0.0
    %1763 = vadd.xlane.f32.xlu0 %v1762
    %v1764 = vpop.xlane.xlu0 %1763
    %v1765 = vsel %vm926, %v1663, 0.0
    %1766 = vadd.xlane.f32.xlu0 %v1765
    %v1767 = vpop.xlane.xlu0 %1766
    %v1768 = vsel %vm926, %v1664, 0.0
    %1769 = vadd.xlane.f32.xlu0 %v1768
    %v1770 = vpop.xlane.xlu0 %1769
    %v1771 = vsel %vm926, %v1665, 0.0
    %1772 = vadd.xlane.f32.xlu0 %v1771
    %v1773 = vpop.xlane.xlu0 %1772
    %v1774 = vsel %vm926, %v1666, 0.0
    %1775 = vadd.xlane.f32.xlu0 %v1774
    %v1776 = vpop.xlane.xlu0 %1775
    %v1777 = vsel %vm926, %v1667, 0.0
    %1778 = vadd.xlane.f32.xlu0 %v1777
    %v1779 = vpop.xlane.xlu0 %1778
    %v1780 = vsel %vm926, %v1668, 0.0
    %1781 = vadd.xlane.f32.xlu0 %v1780
    %v1782 = vpop.xlane.xlu0 %1781
    %v1783 = vsel %vm926, %v1669, 0.0
    %1784 = vadd.xlane.f32.xlu0 %v1783
    %v1785 = vpop.xlane.xlu0 %1784
    %v1786 = vsel %vm926, %v1670, 0.0
    %1787 = vadd.xlane.f32.xlu0 %v1786
    %v1788 = vpop.xlane.xlu0 %1787
    %v1789 = vsel %vm926, %v1671, 0.0
    %1790 = vadd.xlane.f32.xlu0 %v1789
    %v1791 = vpop.xlane.xlu0 %1790
    %v1792 = vmul.f32 %v1674, %v1674
    %v1793 = vmul.f32 %v1677, %v1677
    %v1794 = vmul.f32 %v1680, %v1680
    %v1795 = vmul.f32 %v1683, %v1683
    %v1796 = vmul.f32 %v1686, %v1686
    %v1797 = vmul.f32 %v1689, %v1689
    %v1798 = vmul.f32 %v1692, %v1692
    %v1799 = vmul.f32 %v1695, %v1695
    %v1800 = vmul.f32 %v1698, %v1698
    %v1801 = vmul.f32 %v1701, %v1701
    %v1802 = vmul.f32 %v1704, %v1704
    %v1803 = vmul.f32 %v1707, %v1707
    %v1804 = vmul.f32 %v1710, %v1710
    %v1805 = vmul.f32 %v1713, %v1713
    %v1806 = vmul.f32 %v1716, %v1716
    %v1807 = vmul.f32 %v1719, %v1719
    %v1808 = vmul.f32 %v1722, %v1722
    %v1809 = vmul.f32 %v1725, %v1725
    %v1810 = vmul.f32 %v1728, %v1728
    %v1811 = vmul.f32 %v1731, %v1731
    %v1812 = vmul.f32 %v1734, %v1734
    %v1813 = vmul.f32 %v1737, %v1737
    %v1814 = vmul.f32 %v1740, %v1740
    %v1815 = vmul.f32 %v1743, %v1743
    %v1816 = vmul.f32 %v1746, %v1746
    %v1817 = vmul.f32 %v1749, %v1749
    %v1818 = vmul.f32 %v1752, %v1752
    %v1819 = vmul.f32 %v1755, %v1755
    %v1820 = vmul.f32 %v1758, %v1758
    %v1821 = vmul.f32 %v1761, %v1761
    %v1822 = vmul.f32 %v1764, %v1764
    %v1823 = vmul.f32 %v1767, %v1767
    %v1824 = vmul.f32 %v1770, %v1770
    %v1825 = vmul.f32 %v1773, %v1773
    %v1826 = vmul.f32 %v1776, %v1776
    %v1827 = vmul.f32 %v1779, %v1779
    %v1828 = vmul.f32 %v1782, %v1782
    %v1829 = vmul.f32 %v1785, %v1785
    %v1830 = vmul.f32 %v1788, %v1788
    %v1831 = vmul.f32 %v1791, %v1791
    %v1872 = vlaneseq
    %v1873 = vand.u32 %v1872, 127
    %v1874 = vlaneseq
    %v1875 = vshrl.u32 %v1874, 7
    %v1876 = vsub.s32 %v1873, %v1875
    %v1877 = vrot.slane %v1792, %v1876
    %v1878 = vadd.s32 %v1873, 4294967288
    %v1879 = vlaneseq
    %v1880 = vshrl.u32 %v1879, 7
    %v1881 = vsub.s32 %v1878, %v1880
    %v1882 = vrot.slane %v1793, %v1881
    %vm1883 = vcmask 130112
    %v1884 = vsel %vm1883, %v1882, %v1877
    %v1885 = vlaneseq
    %v1886 = vshrl.u32 %v1885, 7
    %v1887 = vsub.s32 %v1873, %v1886
    %v1888 = vrot.slane %v1794, %v1887
    %v1889 = vlaneseq
    %v1890 = vshrl.u32 %v1889, 7
    %v1891 = vsub.s32 %v1878, %v1890
    %v1892 = vrot.slane %v1795, %v1891
    %v1893 = vsel %vm1883, %v1892, %v1888
    %v1894 = vlaneseq
    %v1895 = vshrl.u32 %v1894, 7
    %v1896 = vsub.s32 %v1873, %v1895
    %v1897 = vrot.slane %v1796, %v1896
    %v1898 = vlaneseq
    %v1899 = vshrl.u32 %v1898, 7
    %v1900 = vsub.s32 %v1878, %v1899
    %v1901 = vrot.slane %v1797, %v1900
    %v1902 = vsel %vm1883, %v1901, %v1897
    %v1903 = vlaneseq
    %v1904 = vshrl.u32 %v1903, 7
    %v1905 = vsub.s32 %v1873, %v1904
    %v1906 = vrot.slane %v1798, %v1905
    %v1907 = vlaneseq
    %v1908 = vshrl.u32 %v1907, 7
    %v1909 = vsub.s32 %v1878, %v1908
    %v1910 = vrot.slane %v1799, %v1909
    %v1911 = vsel %vm1883, %v1910, %v1906
    %v1912 = vlaneseq
    %v1913 = vshrl.u32 %v1912, 7
    %v1914 = vsub.s32 %v1873, %v1913
    %v1915 = vrot.slane %v1800, %v1914
    %v1916 = vlaneseq
    %v1917 = vshrl.u32 %v1916, 7
    %v1918 = vsub.s32 %v1878, %v1917
    %v1919 = vrot.slane %v1801, %v1918
    %v1920 = vsel %vm1883, %v1919, %v1915
    %v1921 = vlaneseq
    %v1922 = vshrl.u32 %v1921, 7
    %v1923 = vsub.s32 %v1873, %v1922
    %v1924 = vrot.slane %v1802, %v1923
    %v1925 = vlaneseq
    %v1926 = vshrl.u32 %v1925, 7
    %v1927 = vsub.s32 %v1878, %v1926
    %v1928 = vrot.slane %v1803, %v1927
    %v1929 = vsel %vm1883, %v1928, %v1924
    %v1930 = vlaneseq
    %v1931 = vshrl.u32 %v1930, 7
    %v1932 = vsub.s32 %v1873, %v1931
    %v1933 = vrot.slane %v1804, %v1932
    %v1934 = vlaneseq
    %v1935 = vshrl.u32 %v1934, 7
    %v1936 = vsub.s32 %v1878, %v1935
    %v1937 = vrot.slane %v1805, %v1936
    %v1938 = vsel %vm1883, %v1937, %v1933
    %v1939 = vlaneseq
    %v1940 = vshrl.u32 %v1939, 7
    %v1941 = vsub.s32 %v1873, %v1940
    %v1942 = vrot.slane %v1806, %v1941
    %v1943 = vlaneseq
    %v1944 = vshrl.u32 %v1943, 7
    %v1945 = vsub.s32 %v1878, %v1944
    %v1946 = vrot.slane %v1807, %v1945
    %v1947 = vsel %vm1883, %v1946, %v1942
    %v1948 = vlaneseq
    %v1949 = vshrl.u32 %v1948, 7
    %v1950 = vsub.s32 %v1873, %v1949
    %v1951 = vrot.slane %v1808, %v1950
    %v1952 = vlaneseq
    %v1953 = vshrl.u32 %v1952, 7
    %v1954 = vsub.s32 %v1878, %v1953
    %v1955 = vrot.slane %v1809, %v1954
    %v1956 = vsel %vm1883, %v1955, %v1951
    %v1957 = vlaneseq
    %v1958 = vshrl.u32 %v1957, 7
    %v1959 = vsub.s32 %v1873, %v1958
    %v1960 = vrot.slane %v1810, %v1959
    %v1961 = vlaneseq
    %v1962 = vshrl.u32 %v1961, 7
    %v1963 = vsub.s32 %v1878, %v1962
    %v1964 = vrot.slane %v1811, %v1963
    %v1965 = vsel %vm1883, %v1964, %v1960
    %v1966 = vlaneseq
    %v1967 = vshrl.u32 %v1966, 7
    %v1968 = vsub.s32 %v1873, %v1967
    %v1969 = vrot.slane %v1812, %v1968
    %v1970 = vlaneseq
    %v1971 = vshrl.u32 %v1970, 7
    %v1972 = vsub.s32 %v1878, %v1971
    %v1973 = vrot.slane %v1813, %v1972
    %v1974 = vsel %vm1883, %v1973, %v1969
    %v1975 = vlaneseq
    %v1976 = vshrl.u32 %v1975, 7
    %v1977 = vsub.s32 %v1873, %v1976
    %v1978 = vrot.slane %v1814, %v1977
    %v1979 = vlaneseq
    %v1980 = vshrl.u32 %v1979, 7
    %v1981 = vsub.s32 %v1878, %v1980
    %v1982 = vrot.slane %v1815, %v1981
    %v1983 = vsel %vm1883, %v1982, %v1978
    %v1984 = vlaneseq
    %v1985 = vshrl.u32 %v1984, 7
    %v1986 = vsub.s32 %v1873, %v1985
    %v1987 = vrot.slane %v1816, %v1986
    %v1988 = vlaneseq
    %v1989 = vshrl.u32 %v1988, 7
    %v1990 = vsub.s32 %v1878, %v1989
    %v1991 = vrot.slane %v1817, %v1990
    %v1992 = vsel %vm1883, %v1991, %v1987
    %v1993 = vlaneseq
    %v1994 = vshrl.u32 %v1993, 7
    %v1995 = vsub.s32 %v1873, %v1994
    %v1996 = vrot.slane %v1818, %v1995
    %v1997 = vlaneseq
    %v1998 = vshrl.u32 %v1997, 7
    %v1999 = vsub.s32 %v1878, %v1998
    %v2000 = vrot.slane %v1819, %v1999
    %v2001 = vsel %vm1883, %v2000, %v1996
    %v2002 = vlaneseq
    %v2003 = vshrl.u32 %v2002, 7
    %v2004 = vsub.s32 %v1873, %v2003
    %v2005 = vrot.slane %v1820, %v2004
    %v2006 = vlaneseq
    %v2007 = vshrl.u32 %v2006, 7
    %v2008 = vsub.s32 %v1878, %v2007
    %v2009 = vrot.slane %v1821, %v2008
    %v2010 = vsel %vm1883, %v2009, %v2005
    %v2011 = vlaneseq
    %v2012 = vshrl.u32 %v2011, 7
    %v2013 = vsub.s32 %v1873, %v2012
    %v2014 = vrot.slane %v1822, %v2013
    %v2015 = vlaneseq
    %v2016 = vshrl.u32 %v2015, 7
    %v2017 = vsub.s32 %v1878, %v2016
    %v2018 = vrot.slane %v1823, %v2017
    %v2019 = vsel %vm1883, %v2018, %v2014
    %v2020 = vlaneseq
    %v2021 = vshrl.u32 %v2020, 7
    %v2022 = vsub.s32 %v1873, %v2021
    %v2023 = vrot.slane %v1824, %v2022
    %v2024 = vlaneseq
    %v2025 = vshrl.u32 %v2024, 7
    %v2026 = vsub.s32 %v1878, %v2025
    %v2027 = vrot.slane %v1825, %v2026
    %v2028 = vsel %vm1883, %v2027, %v2023
    %v2029 = vlaneseq
    %v2030 = vshrl.u32 %v2029, 7
    %v2031 = vsub.s32 %v1873, %v2030
    %v2032 = vrot.slane %v1826, %v2031
    %v2033 = vlaneseq
    %v2034 = vshrl.u32 %v2033, 7
    %v2035 = vsub.s32 %v1878, %v2034
    %v2036 = vrot.slane %v1827, %v2035
    %v2037 = vsel %vm1883, %v2036, %v2032
    %v2038 = vlaneseq
    %v2039 = vshrl.u32 %v2038, 7
    %v2040 = vsub.s32 %v1873, %v2039
    %v2041 = vrot.slane %v1828, %v2040
    %v2042 = vlaneseq
    %v2043 = vshrl.u32 %v2042, 7
    %v2044 = vsub.s32 %v1878, %v2043
    %v2045 = vrot.slane %v1829, %v2044
    %v2046 = vsel %vm1883, %v2045, %v2041
    %v2047 = vlaneseq
    %v2048 = vshrl.u32 %v2047, 7
    %v2049 = vsub.s32 %v1873, %v2048
    %v2050 = vrot.slane %v1830, %v2049
    %v2051 = vlaneseq
    %v2052 = vshrl.u32 %v2051, 7
    %v2053 = vsub.s32 %v1878, %v2052
    %v2054 = vrot.slane %v1831, %v2053
    %v2055 = vsel %vm1883, %v2054, %v2050
    %vm2056 = vcmask 1041409
    %v2057 = vsel %vm2056, %v1893, %v1884
    %v2058 = vsel %vm2056, %v1911, %v1902
    %v2059 = vsel %vm2056, %v1929, %v1920
    %v2060 = vsel %vm2056, %v1947, %v1938
    %v2061 = vsel %vm2056, %v1965, %v1956
    %v2062 = vsel %vm2056, %v1983, %v1974
    %v2063 = vsel %vm2056, %v2001, %v1992
    %v2064 = vsel %vm2056, %v2019, %v2010
    %v2065 = vsel %vm2056, %v2037, %v2028
    %v2066 = vsel %vm2056, %v2055, %v2046
    %vm2077 = vcmask 123904
    %v2078 = vsel %vm2077, %v2057, 0.0
    %2079 = vadd.xlane.f32.xlu0 %v2078
    %v2080 = vpop.xlane.xlu0 %2079
    %v2081 = vsel %vm2077, %v2058, 0.0
    %2082 = vadd.xlane.f32.xlu0 %v2081
    %v2083 = vpop.xlane.xlu0 %2082
    %v2084 = vsel %vm2077, %v2059, 0.0
    %2085 = vadd.xlane.f32.xlu0 %v2084
    %v2086 = vpop.xlane.xlu0 %2085
    %v2087 = vsel %vm2077, %v2060, 0.0
    %2088 = vadd.xlane.f32.xlu0 %v2087
    %v2089 = vpop.xlane.xlu0 %2088
    %v2090 = vsel %vm2077, %v2061, 0.0
    %2091 = vadd.xlane.f32.xlu0 %v2090
    %v2092 = vpop.xlane.xlu0 %2091
    %v2093 = vsel %vm2077, %v2062, 0.0
    %2094 = vadd.xlane.f32.xlu0 %v2093
    %v2095 = vpop.xlane.xlu0 %2094
    %v2096 = vsel %vm2077, %v2063, 0.0
    %2097 = vadd.xlane.f32.xlu0 %v2096
    %v2098 = vpop.xlane.xlu0 %2097
    %v2099 = vsel %vm2077, %v2064, 0.0
    %2100 = vadd.xlane.f32.xlu0 %v2099
    %v2101 = vpop.xlane.xlu0 %2100
    %v2102 = vsel %vm2077, %v2065, 0.0
    %2103 = vadd.xlane.f32.xlu0 %v2102
    %v2104 = vpop.xlane.xlu0 %2103
    %v2105 = vsel %vm2077, %v2066, 0.0
    %2106 = vadd.xlane.f32.xlu0 %v2105
    %v2107 = vpop.xlane.xlu0 %2106
    %v2108 = vadd.f32 %v2080, 1e-12
    %v2109 = vadd.f32 %v2083, 1e-12
    %v2110 = vadd.f32 %v2086, 1e-12
    %v2111 = vadd.f32 %v2089, 1e-12
    %v2112 = vadd.f32 %v2092, 1e-12
    %v2113 = vadd.f32 %v2095, 1e-12
    %v2114 = vadd.f32 %v2098, 1e-12
    %v2115 = vadd.f32 %v2101, 1e-12
    %v2116 = vadd.f32 %v2104, 1e-12
    %v2117 = vadd.f32 %v2107, 1e-12
    %v2118 = vrsqrt.pop %v2108
    %v2119 = vrsqrt.pop %v2109
    %v2120 = vrsqrt.pop %v2110
    %v2121 = vrsqrt.pop %v2111
    %v2122 = vrsqrt.pop %v2112
    %v2123 = vrsqrt.pop %v2113
    %v2124 = vrsqrt.pop %v2114
    %v2125 = vrsqrt.pop %v2115
    %v2126 = vrsqrt.pop %v2116
    %v2127 = vrsqrt.pop %v2117
    %v2128 = vmul.f32 %v2080, %v2118
    %v2129 = vmul.f32 %v2083, %v2119
    %v2130 = vmul.f32 %v2086, %v2120
    %v2131 = vmul.f32 %v2089, %v2121
    %v2132 = vmul.f32 %v2092, %v2122
    %v2133 = vmul.f32 %v2095, %v2123
    %v2134 = vmul.f32 %v2098, %v2124
    %v2135 = vmul.f32 %v2101, %v2125
    %v2136 = vmul.f32 %v2104, %v2126
    %v2137 = vmul.f32 %v2107, %v2127
    %v2138 = vadd.f32 %v2080, 1.0
    %v2139 = vadd.f32 %v2083, 1.0
    %v2140 = vadd.f32 %v2086, 1.0
    %v2141 = vadd.f32 %v2089, 1.0
    %v2142 = vadd.f32 %v2092, 1.0
    %v2143 = vadd.f32 %v2095, 1.0
    %v2144 = vadd.f32 %v2098, 1.0
    %v2145 = vadd.f32 %v2101, 1.0
    %v2146 = vadd.f32 %v2104, 1.0
    %v2147 = vadd.f32 %v2107, 1.0
    %v2148 = vrcp.pop %v2138
    %v2149 = vrcp.pop %v2139
    %v2150 = vrcp.pop %v2140
    %v2151 = vrcp.pop %v2141
    %v2152 = vrcp.pop %v2142
    %v2153 = vrcp.pop %v2143
    %v2154 = vrcp.pop %v2144
    %v2155 = vrcp.pop %v2145
    %v2156 = vrcp.pop %v2146
    %v2157 = vrcp.pop %v2147
    %v2158 = vmul.f32 %v2128, %v2148
    %v2159 = vmul.f32 %v2129, %v2149
    %v2160 = vmul.f32 %v2130, %v2150
    %v2161 = vmul.f32 %v2131, %v2151
    %v2162 = vmul.f32 %v2132, %v2152
    %v2163 = vmul.f32 %v2133, %v2153
    %v2164 = vmul.f32 %v2134, %v2154
    %v2165 = vmul.f32 %v2135, %v2155
    %v2166 = vmul.f32 %v2136, %v2156
    %v2167 = vmul.f32 %v2137, %v2157
    %v2178 = vlaneseq
    %v2179 = vshrl.u32 %v2178, 7
    %v2180 = vsub.s32 0, %v2179
    %v2181 = vrot.slane %v2158, %v2180
    %v2182 = vlaneseq
    %v2183 = vshrl.u32 %v2182, 7
    %v2184 = vsub.s32 1, %v2183
    %v2185 = vrot.slane %v2158, %v2184
    %v2186 = vlaneseq
    %v2187 = vshrl.u32 %v2186, 7
    %v2188 = vsub.s32 0, %v2187
    %v2189 = vrot.slane %v2159, %v2188
    %v2190 = vlaneseq
    %v2191 = vshrl.u32 %v2190, 7
    %v2192 = vsub.s32 1, %v2191
    %v2193 = vrot.slane %v2159, %v2192
    %v2194 = vlaneseq
    %v2195 = vshrl.u32 %v2194, 7
    %v2196 = vsub.s32 0, %v2195
    %v2197 = vrot.slane %v2160, %v2196
    %v2198 = vlaneseq
    %v2199 = vshrl.u32 %v2198, 7
    %v2200 = vsub.s32 1, %v2199
    %v2201 = vrot.slane %v2160, %v2200
    %v2202 = vlaneseq
    %v2203 = vshrl.u32 %v2202, 7
    %v2204 = vsub.s32 0, %v2203
    %v2205 = vrot.slane %v2161, %v2204
    %v2206 = vlaneseq
    %v2207 = vshrl.u32 %v2206, 7
    %v2208 = vsub.s32 1, %v2207
    %v2209 = vrot.slane %v2161, %v2208
    %v2210 = vlaneseq
    %v2211 = vshrl.u32 %v2210, 7
    %v2212 = vsub.s32 0, %v2211
    %v2213 = vrot.slane %v2162, %v2212
    %v2214 = vlaneseq
    %v2215 = vshrl.u32 %v2214, 7
    %v2216 = vsub.s32 1, %v2215
    %v2217 = vrot.slane %v2162, %v2216
    %v2218 = vlaneseq
    %v2219 = vshrl.u32 %v2218, 7
    %v2220 = vsub.s32 0, %v2219
    %v2221 = vrot.slane %v2163, %v2220
    %v2222 = vlaneseq
    %v2223 = vshrl.u32 %v2222, 7
    %v2224 = vsub.s32 1, %v2223
    %v2225 = vrot.slane %v2163, %v2224
    %v2226 = vlaneseq
    %v2227 = vshrl.u32 %v2226, 7
    %v2228 = vsub.s32 0, %v2227
    %v2229 = vrot.slane %v2164, %v2228
    %v2230 = vlaneseq
    %v2231 = vshrl.u32 %v2230, 7
    %v2232 = vsub.s32 1, %v2231
    %v2233 = vrot.slane %v2164, %v2232
    %v2234 = vlaneseq
    %v2235 = vshrl.u32 %v2234, 7
    %v2236 = vsub.s32 0, %v2235
    %v2237 = vrot.slane %v2165, %v2236
    %v2238 = vlaneseq
    %v2239 = vshrl.u32 %v2238, 7
    %v2240 = vsub.s32 1, %v2239
    %v2241 = vrot.slane %v2165, %v2240
    %v2242 = vlaneseq
    %v2243 = vshrl.u32 %v2242, 7
    %v2244 = vsub.s32 0, %v2243
    %v2245 = vrot.slane %v2166, %v2244
    %v2246 = vlaneseq
    %v2247 = vshrl.u32 %v2246, 7
    %v2248 = vsub.s32 1, %v2247
    %v2249 = vrot.slane %v2166, %v2248
    %v2250 = vlaneseq
    %v2251 = vshrl.u32 %v2250, 7
    %v2252 = vsub.s32 0, %v2251
    %v2253 = vrot.slane %v2167, %v2252
    %v2254 = vlaneseq
    %v2255 = vshrl.u32 %v2254, 7
    %v2256 = vsub.s32 1, %v2255
    %v2257 = vrot.slane %v2167, %v2256
    %v2278 = vmul.f32 %v1674, %v2181
    %v2279 = vmul.f32 %v1677, %v2181
    %v2280 = vmul.f32 %v1680, %v2185
    %v2281 = vmul.f32 %v1683, %v2185
    %v2282 = vmul.f32 %v1686, %v2189
    %v2283 = vmul.f32 %v1689, %v2189
    %v2284 = vmul.f32 %v1692, %v2193
    %v2285 = vmul.f32 %v1695, %v2193
    %v2286 = vmul.f32 %v1698, %v2197
    %v2287 = vmul.f32 %v1701, %v2197
    %v2288 = vmul.f32 %v1704, %v2201
    %v2289 = vmul.f32 %v1707, %v2201
    %v2290 = vmul.f32 %v1710, %v2205
    %v2291 = vmul.f32 %v1713, %v2205
    %v2292 = vmul.f32 %v1716, %v2209
    %v2293 = vmul.f32 %v1719, %v2209
    %v2294 = vmul.f32 %v1722, %v2213
    %v2295 = vmul.f32 %v1725, %v2213
    %v2296 = vmul.f32 %v1728, %v2217
    %v2297 = vmul.f32 %v1731, %v2217
    %v2298 = vmul.f32 %v1734, %v2221
    %v2299 = vmul.f32 %v1737, %v2221
    %v2300 = vmul.f32 %v1740, %v2225
    %v2301 = vmul.f32 %v1743, %v2225
    %v2302 = vmul.f32 %v1746, %v2229
    %v2303 = vmul.f32 %v1749, %v2229
    %v2304 = vmul.f32 %v1752, %v2233
    %v2305 = vmul.f32 %v1755, %v2233
    %v2306 = vmul.f32 %v1758, %v2237
    %v2307 = vmul.f32 %v1761, %v2237
    %v2308 = vmul.f32 %v1764, %v2241
    %v2309 = vmul.f32 %v1767, %v2241
    %v2310 = vmul.f32 %v1770, %v2245
    %v2311 = vmul.f32 %v1773, %v2245
    %v2312 = vmul.f32 %v1776, %v2249
    %v2313 = vmul.f32 %v1779, %v2249
    %v2314 = vmul.f32 %v1782, %v2253
    %v2315 = vmul.f32 %v1785, %v2253
    %v2316 = vmul.f32 %v1788, %v2257
    %v2317 = vmul.f32 %v1791, %v2257
    %2358 = vset.pattern.permute.xlu0 0
    %2359 = vperm.xlu0 %2358, %v2278
    %v2360 = vpop.permute.xlu0 %2359
    %2361 = vset.pattern.permute.xlu0 0
    %2362 = vperm.xlu0 %2361, %v2279
    %v2363 = vpop.permute.xlu0 %2362
    %2364 = vset.pattern.permute.xlu0 0
    %2365 = vperm.xlu0 %2364, %v2280
    %v2366 = vpop.permute.xlu0 %2365
    %2367 = vset.pattern.permute.xlu0 0
    %2368 = vperm.xlu0 %2367, %v2281
    %v2369 = vpop.permute.xlu0 %2368
    %2370 = vset.pattern.permute.xlu0 0
    %2371 = vperm.xlu0 %2370, %v2282
    %v2372 = vpop.permute.xlu0 %2371
    %2373 = vset.pattern.permute.xlu0 0
    %2374 = vperm.xlu0 %2373, %v2283
    %v2375 = vpop.permute.xlu0 %2374
    %2376 = vset.pattern.permute.xlu0 0
    %2377 = vperm.xlu0 %2376, %v2284
    %v2378 = vpop.permute.xlu0 %2377
    %2379 = vset.pattern.permute.xlu0 0
    %2380 = vperm.xlu0 %2379, %v2285
    %v2381 = vpop.permute.xlu0 %2380
    %2382 = vset.pattern.permute.xlu0 0
    %2383 = vperm.xlu0 %2382, %v2286
    %v2384 = vpop.permute.xlu0 %2383
    %2385 = vset.pattern.permute.xlu0 0
    %2386 = vperm.xlu0 %2385, %v2287
    %v2387 = vpop.permute.xlu0 %2386
    %2388 = vset.pattern.permute.xlu0 0
    %2389 = vperm.xlu0 %2388, %v2288
    %v2390 = vpop.permute.xlu0 %2389
    %2391 = vset.pattern.permute.xlu0 0
    %2392 = vperm.xlu0 %2391, %v2289
    %v2393 = vpop.permute.xlu0 %2392
    %2394 = vset.pattern.permute.xlu0 0
    %2395 = vperm.xlu0 %2394, %v2290
    %v2396 = vpop.permute.xlu0 %2395
    %2397 = vset.pattern.permute.xlu0 0
    %2398 = vperm.xlu0 %2397, %v2291
    %v2399 = vpop.permute.xlu0 %2398
    %2400 = vset.pattern.permute.xlu0 0
    %2401 = vperm.xlu0 %2400, %v2292
    %v2402 = vpop.permute.xlu0 %2401
    %2403 = vset.pattern.permute.xlu0 0
    %2404 = vperm.xlu0 %2403, %v2293
    %v2405 = vpop.permute.xlu0 %2404
    %2406 = vset.pattern.permute.xlu0 0
    %2407 = vperm.xlu0 %2406, %v2294
    %v2408 = vpop.permute.xlu0 %2407
    %2409 = vset.pattern.permute.xlu0 0
    %2410 = vperm.xlu0 %2409, %v2295
    %v2411 = vpop.permute.xlu0 %2410
    %2412 = vset.pattern.permute.xlu0 0
    %2413 = vperm.xlu0 %2412, %v2296
    %v2414 = vpop.permute.xlu0 %2413
    %2415 = vset.pattern.permute.xlu0 0
    %2416 = vperm.xlu0 %2415, %v2297
    %v2417 = vpop.permute.xlu0 %2416
    %2418 = vset.pattern.permute.xlu0 0
    %2419 = vperm.xlu0 %2418, %v2298
    %v2420 = vpop.permute.xlu0 %2419
    %2421 = vset.pattern.permute.xlu0 0
    %2422 = vperm.xlu0 %2421, %v2299
    %v2423 = vpop.permute.xlu0 %2422
    %2424 = vset.pattern.permute.xlu0 0
    %2425 = vperm.xlu0 %2424, %v2300
    %v2426 = vpop.permute.xlu0 %2425
    %2427 = vset.pattern.permute.xlu0 0
    %2428 = vperm.xlu0 %2427, %v2301
    %v2429 = vpop.permute.xlu0 %2428
    %2430 = vset.pattern.permute.xlu0 0
    %2431 = vperm.xlu0 %2430, %v2302
    %v2432 = vpop.permute.xlu0 %2431
    %2433 = vset.pattern.permute.xlu0 0
    %2434 = vperm.xlu0 %2433, %v2303
    %v2435 = vpop.permute.xlu0 %2434
    %2436 = vset.pattern.permute.xlu0 0
    %2437 = vperm.xlu0 %2436, %v2304
    %v2438 = vpop.permute.xlu0 %2437
    %2439 = vset.pattern.permute.xlu0 0
    %2440 = vperm.xlu0 %2439, %v2305
    %v2441 = vpop.permute.xlu0 %2440
    %2442 = vset.pattern.permute.xlu0 0
    %2443 = vperm.xlu0 %2442, %v2306
    %v2444 = vpop.permute.xlu0 %2443
    %2445 = vset.pattern.permute.xlu0 0
    %2446 = vperm.xlu0 %2445, %v2307
    %v2447 = vpop.permute.xlu0 %2446
    %2448 = vset.pattern.permute.xlu0 0
    %2449 = vperm.xlu0 %2448, %v2308
    %v2450 = vpop.permute.xlu0 %2449
    %2451 = vset.pattern.permute.xlu0 0
    %2452 = vperm.xlu0 %2451, %v2309
    %v2453 = vpop.permute.xlu0 %2452
    %2454 = vset.pattern.permute.xlu0 0
    %2455 = vperm.xlu0 %2454, %v2310
    %v2456 = vpop.permute.xlu0 %2455
    %2457 = vset.pattern.permute.xlu0 0
    %2458 = vperm.xlu0 %2457, %v2311
    %v2459 = vpop.permute.xlu0 %2458
    %2460 = vset.pattern.permute.xlu0 0
    %2461 = vperm.xlu0 %2460, %v2312
    %v2462 = vpop.permute.xlu0 %2461
    %2463 = vset.pattern.permute.xlu0 0
    %2464 = vperm.xlu0 %2463, %v2313
    %v2465 = vpop.permute.xlu0 %2464
    %2466 = vset.pattern.permute.xlu0 0
    %2467 = vperm.xlu0 %2466, %v2314
    %v2468 = vpop.permute.xlu0 %2467
    %2469 = vset.pattern.permute.xlu0 0
    %2470 = vperm.xlu0 %2469, %v2315
    %v2471 = vpop.permute.xlu0 %2470
    %2472 = vset.pattern.permute.xlu0 0
    %2473 = vperm.xlu0 %2472, %v2316
    %v2474 = vpop.permute.xlu0 %2473
    %2475 = vset.pattern.permute.xlu0 0
    %2476 = vperm.xlu0 %2475, %v2317
    %v2477 = vpop.permute.xlu0 %2476
    %v2478 = vlaneseq
    %v2479 = vshrl.u32 %v2478, 7
    %v2480 = vsub.s32 %v1873, %v2479
    %v2481 = vrot.slane %v2360, %v2480
    %v2482 = vlaneseq
    %v2483 = vshrl.u32 %v2482, 7
    %v2484 = vsub.s32 %v1878, %v2483
    %v2485 = vrot.slane %v2363, %v2484
    %v2486 = vsel %vm1883, %v2485, %v2481
    %v2487 = vlaneseq
    %v2488 = vshrl.u32 %v2487, 7
    %v2489 = vsub.s32 %v1873, %v2488
    %v2490 = vrot.slane %v2366, %v2489
    %v2491 = vlaneseq
    %v2492 = vshrl.u32 %v2491, 7
    %v2493 = vsub.s32 %v1878, %v2492
    %v2494 = vrot.slane %v2369, %v2493
    %v2495 = vsel %vm1883, %v2494, %v2490
    %v2496 = vlaneseq
    %v2497 = vshrl.u32 %v2496, 7
    %v2498 = vsub.s32 %v1873, %v2497
    %v2499 = vrot.slane %v2372, %v2498
    %v2500 = vlaneseq
    %v2501 = vshrl.u32 %v2500, 7
    %v2502 = vsub.s32 %v1878, %v2501
    %v2503 = vrot.slane %v2375, %v2502
    %v2504 = vsel %vm1883, %v2503, %v2499
    %v2505 = vlaneseq
    %v2506 = vshrl.u32 %v2505, 7
    %v2507 = vsub.s32 %v1873, %v2506
    %v2508 = vrot.slane %v2378, %v2507
    %v2509 = vlaneseq
    %v2510 = vshrl.u32 %v2509, 7
    %v2511 = vsub.s32 %v1878, %v2510
    %v2512 = vrot.slane %v2381, %v2511
    %v2513 = vsel %vm1883, %v2512, %v2508
    %v2514 = vlaneseq
    %v2515 = vshrl.u32 %v2514, 7
    %v2516 = vsub.s32 %v1873, %v2515
    %v2517 = vrot.slane %v2384, %v2516
    %v2518 = vlaneseq
    %v2519 = vshrl.u32 %v2518, 7
    %v2520 = vsub.s32 %v1878, %v2519
    %v2521 = vrot.slane %v2387, %v2520
    %v2522 = vsel %vm1883, %v2521, %v2517
    %v2523 = vlaneseq
    %v2524 = vshrl.u32 %v2523, 7
    %v2525 = vsub.s32 %v1873, %v2524
    %v2526 = vrot.slane %v2390, %v2525
    %v2527 = vlaneseq
    %v2528 = vshrl.u32 %v2527, 7
    %v2529 = vsub.s32 %v1878, %v2528
    %v2530 = vrot.slane %v2393, %v2529
    %v2531 = vsel %vm1883, %v2530, %v2526
    %v2532 = vlaneseq
    %v2533 = vshrl.u32 %v2532, 7
    %v2534 = vsub.s32 %v1873, %v2533
    %v2535 = vrot.slane %v2396, %v2534
    %v2536 = vlaneseq
    %v2537 = vshrl.u32 %v2536, 7
    %v2538 = vsub.s32 %v1878, %v2537
    %v2539 = vrot.slane %v2399, %v2538
    %v2540 = vsel %vm1883, %v2539, %v2535
    %v2541 = vlaneseq
    %v2542 = vshrl.u32 %v2541, 7
    %v2543 = vsub.s32 %v1873, %v2542
    %v2544 = vrot.slane %v2402, %v2543
    %v2545 = vlaneseq
    %v2546 = vshrl.u32 %v2545, 7
    %v2547 = vsub.s32 %v1878, %v2546
    %v2548 = vrot.slane %v2405, %v2547
    %v2549 = vsel %vm1883, %v2548, %v2544
    %v2550 = vlaneseq
    %v2551 = vshrl.u32 %v2550, 7
    %v2552 = vsub.s32 %v1873, %v2551
    %v2553 = vrot.slane %v2408, %v2552
    %v2554 = vlaneseq
    %v2555 = vshrl.u32 %v2554, 7
    %v2556 = vsub.s32 %v1878, %v2555
    %v2557 = vrot.slane %v2411, %v2556
    %v2558 = vsel %vm1883, %v2557, %v2553
    %v2559 = vlaneseq
    %v2560 = vshrl.u32 %v2559, 7
    %v2561 = vsub.s32 %v1873, %v2560
    %v2562 = vrot.slane %v2414, %v2561
    %v2563 = vlaneseq
    %v2564 = vshrl.u32 %v2563, 7
    %v2565 = vsub.s32 %v1878, %v2564
    %v2566 = vrot.slane %v2417, %v2565
    %v2567 = vsel %vm1883, %v2566, %v2562
    %v2568 = vlaneseq
    %v2569 = vshrl.u32 %v2568, 7
    %v2570 = vsub.s32 %v1873, %v2569
    %v2571 = vrot.slane %v2420, %v2570
    %v2572 = vlaneseq
    %v2573 = vshrl.u32 %v2572, 7
    %v2574 = vsub.s32 %v1878, %v2573
    %v2575 = vrot.slane %v2423, %v2574
    %v2576 = vsel %vm1883, %v2575, %v2571
    %v2577 = vlaneseq
    %v2578 = vshrl.u32 %v2577, 7
    %v2579 = vsub.s32 %v1873, %v2578
    %v2580 = vrot.slane %v2426, %v2579
    %v2581 = vlaneseq
    %v2582 = vshrl.u32 %v2581, 7
    %v2583 = vsub.s32 %v1878, %v2582
    %v2584 = vrot.slane %v2429, %v2583
    %v2585 = vsel %vm1883, %v2584, %v2580
    %v2586 = vlaneseq
    %v2587 = vshrl.u32 %v2586, 7
    %v2588 = vsub.s32 %v1873, %v2587
    %v2589 = vrot.slane %v2432, %v2588
    %v2590 = vlaneseq
    %v2591 = vshrl.u32 %v2590, 7
    %v2592 = vsub.s32 %v1878, %v2591
    %v2593 = vrot.slane %v2435, %v2592
    %v2594 = vsel %vm1883, %v2593, %v2589
    %v2595 = vlaneseq
    %v2596 = vshrl.u32 %v2595, 7
    %v2597 = vsub.s32 %v1873, %v2596
    %v2598 = vrot.slane %v2438, %v2597
    %v2599 = vlaneseq
    %v2600 = vshrl.u32 %v2599, 7
    %v2601 = vsub.s32 %v1878, %v2600
    %v2602 = vrot.slane %v2441, %v2601
    %v2603 = vsel %vm1883, %v2602, %v2598
    %v2604 = vlaneseq
    %v2605 = vshrl.u32 %v2604, 7
    %v2606 = vsub.s32 %v1873, %v2605
    %v2607 = vrot.slane %v2444, %v2606
    %v2608 = vlaneseq
    %v2609 = vshrl.u32 %v2608, 7
    %v2610 = vsub.s32 %v1878, %v2609
    %v2611 = vrot.slane %v2447, %v2610
    %v2612 = vsel %vm1883, %v2611, %v2607
    %v2613 = vlaneseq
    %v2614 = vshrl.u32 %v2613, 7
    %v2615 = vsub.s32 %v1873, %v2614
    %v2616 = vrot.slane %v2450, %v2615
    %v2617 = vlaneseq
    %v2618 = vshrl.u32 %v2617, 7
    %v2619 = vsub.s32 %v1878, %v2618
    %v2620 = vrot.slane %v2453, %v2619
    %v2621 = vsel %vm1883, %v2620, %v2616
    %v2622 = vlaneseq
    %v2623 = vshrl.u32 %v2622, 7
    %v2624 = vsub.s32 %v1873, %v2623
    %v2625 = vrot.slane %v2456, %v2624
    %v2626 = vlaneseq
    %v2627 = vshrl.u32 %v2626, 7
    %v2628 = vsub.s32 %v1878, %v2627
    %v2629 = vrot.slane %v2459, %v2628
    %v2630 = vsel %vm1883, %v2629, %v2625
    %v2631 = vlaneseq
    %v2632 = vshrl.u32 %v2631, 7
    %v2633 = vsub.s32 %v1873, %v2632
    %v2634 = vrot.slane %v2462, %v2633
    %v2635 = vlaneseq
    %v2636 = vshrl.u32 %v2635, 7
    %v2637 = vsub.s32 %v1878, %v2636
    %v2638 = vrot.slane %v2465, %v2637
    %v2639 = vsel %vm1883, %v2638, %v2634
    %v2640 = vlaneseq
    %v2641 = vshrl.u32 %v2640, 7
    %v2642 = vsub.s32 %v1873, %v2641
    %v2643 = vrot.slane %v2468, %v2642
    %v2644 = vlaneseq
    %v2645 = vshrl.u32 %v2644, 7
    %v2646 = vsub.s32 %v1878, %v2645
    %v2647 = vrot.slane %v2471, %v2646
    %v2648 = vsel %vm1883, %v2647, %v2643
    %v2649 = vlaneseq
    %v2650 = vshrl.u32 %v2649, 7
    %v2651 = vsub.s32 %v1873, %v2650
    %v2652 = vrot.slane %v2474, %v2651
    %v2653 = vlaneseq
    %v2654 = vshrl.u32 %v2653, 7
    %v2655 = vsub.s32 %v1878, %v2654
    %v2656 = vrot.slane %v2477, %v2655
    %v2657 = vsel %vm1883, %v2656, %v2652
    %v2658 = vsel %vm2056, %v2495, %v2486
    %v2659 = vsel %vm2056, %v2513, %v2504
    %v2660 = vsel %vm2056, %v2531, %v2522
    %v2661 = vsel %vm2056, %v2549, %v2540
    %v2662 = vsel %vm2056, %v2567, %v2558
    %v2663 = vsel %vm2056, %v2585, %v2576
    %v2664 = vsel %vm2056, %v2603, %v2594
    %v2665 = vsel %vm2056, %v2621, %v2612
    %v2666 = vsel %vm2056, %v2639, %v2630
    %v2667 = vsel %vm2056, %v2657, %v2648
    %2678 = vst.msk [vmem:[#allocation7] sm:$0x3] %vm2077, %v2658
    %2679 = vst.msk [vmem:[#allocation7 + $0x2] sm:$0x3] %vm2077, %v2659
    %2680 = vst.msk [vmem:[#allocation7 + $0x4] sm:$0x3] %vm2077, %v2660
    %2681 = vst.msk [vmem:[#allocation7 + $0x6] sm:$0x3] %vm2077, %v2661
    %2682 = vst.msk [vmem:[#allocation7 + $0x8] sm:$0x3] %vm2077, %v2662
    %2683 = vst.msk [vmem:[#allocation7 + $0xa] sm:$0x3] %vm2077, %v2663
    %2684 = vst.msk [vmem:[#allocation7 + $0xc] sm:$0x3] %vm2077, %v2664
    %2685 = vst.msk [vmem:[#allocation7 + $0xe] sm:$0x3] %vm2077, %v2665
    %2686 = vst.msk [vmem:[#allocation7 + $0x10] sm:$0x3] %vm2077, %v2666
    %2687 = vst.msk [vmem:[#allocation7 + $0x12] sm:$0x3] %vm2077, %v2667
    // Predicated region
    $region18: #{tpu_custom_call.1} parent=1 // pred_check
      _
    $region19: #{tpu_custom_call.1} parent=1 // pred_check_branch
      %2689 = sbr.rel (0) target = $region21
    $region20: #{tpu_custom_call.1} parent=1 // pred_region
      %s2691 = ssub.s32 320, 320
      %2692 = vsyncadd [#allocation4], %s2691
      %s2693 = sshll.u32 [#allocation7], 4
      %s2694 = int_to_ptr.vmem [resolvable:$true] %s2693
      %2699 = dma.vmem_to_hbm [thread:$0]  %s2694, 320, %s2, [#allocation4], 32, 32, 2
    $region21: #{tpu_custom_call.1} parent=1 // pred_fallthru
      _
    // Predicated region
    $region22: #{tpu_custom_call.1} parent=1 // pred_check
      _
    $region23: #{tpu_custom_call.1} parent=1 // pred_check_branch
      %2701 = sbr.rel (0) target = $region25
    $region24: #{tpu_custom_call.1} parent=1 // pred_region
      %2702 = dma.done [#allocation4], 320
    $region25: #{tpu_custom_call.1} parent=1 // pred_fallthru
      _
    %2703 = vsyncpa [#allocation3], 1
    %2704 = vsyncpa [#allocation6], 1
    %2705 = vsyncpa [#allocation4], 1

</llo_original>
